<compile_context>
chip_gen: v5e
topology: v5e:2x2
jax: 0.10.0
libtpu: 0.0.40
codegen_flags: <defaults>
</compile_context>

<pallas_src>
import functools

import numpy as np

import jax
import jax.numpy as jnp
from jax import lax
from jax.experimental import pallas as pl
from jax.experimental.pallas import tpu as pltpu

BN_EPS = 1e-4


# ----------------------------------------------------------------------------
# Fused Pallas kernel
# ----------------------------------------------------------------------------
def _stack_decoder_kernel(x_ref, down_ref, mT_ref, mask_ref,
                          w1_ref, g1_ref, b1_ref,
                          w2_ref, g2_ref, b2_ref,
                          w3_ref, g3_ref, b3_ref,
                          out_ref, act_ref, cols_ref, *, out_w):
    """Fused StackDecoder forward (single invocation, everything in VMEM).

    x_ref    : (N*Cx, h*w)      deep feature, batch folded into sublanes
    down_ref : (N, Cd, H*W)     skip feature (free reshape of NCHW)
    mT_ref   : (h*w, H*W)       transposed align_corners bilinear matrix
    mask_ref : (9, N*H*W)       per-tap zero-padding masks (same for every image)
    w*_ref   : (Cout, 9*Cin)    transposed im2col conv weights per layer
    g*/b*_ref: (Cout, 1)        BN gamma / beta (broadcast along lanes)
    out_ref  : (N, Cy, H*W)     output (reshape-only back to NCHW in the wrapper)
    act_ref  : (C0, N*H*W)      VMEM scratch for the upsample+concat activation
    cols_ref : (9*Cmax, N*H*W)  VMEM im2col slab (lane-dense, sublane-aligned)
    """
    n_cx, _ = x_ref.shape
    n_batch, c_down, hw_out = down_ref.shape
    c_x = n_cx // n_batch
    c0 = c_x + c_down
    nhw = n_batch * hw_out
    w_img = out_w

    # ---- bilinear (align_corners) upsample: ONE MXU matmul whose result lanes
    # are the spatial axis; lands directly in the layout the convs consume.
    up = jnp.dot(x_ref[...], mT_ref[...],
                 preferred_element_type=jnp.float32)             # (N*Cx, H*W)

    # ---- channel concat fused into the activation slab (lane-dense stores).
    for n in range(n_batch):                                     # N small & static
        act_ref[0:c_x, n * hw_out:(n + 1) * hw_out] = up[n * c_x:(n + 1) * c_x, :]
        act_ref[c_x:c0, n * hw_out:(n + 1) * hw_out] = down_ref[n]

    # Tap masks are shared by all three layers -> load once.
    masks = [mask_ref[t:t + 1, :] for t in range(9)]             # each (1, N*H*W)

    layers = ((w1_ref, g1_ref, b1_ref),
              (w2_ref, g2_ref, b2_ref),
              (w3_ref, g3_ref, b3_ref))
    inv_count = 1.0 / float(nhw)

    act = act_ref[...]                                           # (C0, N*H*W)
    for w_ref, g_ref, b_ref in layers:
        c_out, kcin = w_ref.shape
        c_in = kcin // 9
        a_in = act[0:c_in, :]

        # roll-based im2col: each tap = one lane rotation (XLU) + mask multiply
        # (VPU) + one full-width, sublane-aligned store into the cols slab.
        for t in range(9):
            dy, dx = t // 3 - 1, t % 3 - 1
            off = dy * w_img + dx
            tap = a_in if off == 0 else pltpu.roll(a_in, shift=(-off) % nhw, axis=1)
            cols_ref[t * c_in:(t + 1) * c_in, :] = tap * masks[t]

        # Conv3x3 as ONE matmul; result is (Cout sublanes, N*H*W lanes).
        y = jnp.dot(w_ref[...], cols_ref[0:kcin, :],
                    preferred_element_type=jnp.float32)          # (Cout, N*H*W)

        # Training-mode BatchNorm (biased batch stats, eps=1e-4) + ReLU.
        # `centered` is computed once and reused for variance and normalization.
        mean = jnp.sum(y, axis=1, keepdims=True) * inv_count
        centered = y - mean
        var = jnp.sum(centered * centered, axis=1, keepdims=True) * inv_count
        scale = lax.rsqrt(var + BN_EPS) * g_ref[...]
        act = jnp.maximum(centered * scale + b_ref[...], 0.0)

    # ---- lane-dense output store: (Cy sublanes) x (H*W lanes) per image.
    for n in range(n_batch):
        out_ref[n] = act[:, n * hw_out:(n + 1) * hw_out]


# ----------------------------------------------------------------------------
# Wrapper (compile-time constants + layout plumbing, reshape-only at boundaries)
# ----------------------------------------------------------------------------
def _bilinear_matrix(in_h, in_w, out_h, out_w):
    """(out_h*out_w, in_h*in_w) matrix implementing align_corners=True bilinear."""
    def axis_mat(out_size, in_size):
        m = np.zeros((out_size, in_size), dtype=np.float64)
        scale = (in_size - 1) / (out_size - 1) if out_size > 1 else 0.0
        f = np.arange(out_size, dtype=np.float64) * scale
        i0 = np.clip(np.floor(f).astype(np.int64), 0, in_size - 1)
        i1 = np.clip(i0 + 1, 0, in_size - 1)
        t = f - i0
        rows = np.arange(out_size)
        np.add.at(m, (rows, i0), 1.0 - t)
        np.add.at(m, (rows, i1), t)
        return m

    ah = axis_mat(out_h, in_h)
    aw = axis_mat(out_w, in_w)
    m2d = np.einsum('ip,jq->ijpq', ah, aw).reshape(out_h * out_w, in_h * in_w)
    return m2d.astype(np.float32)


def _tap_masks(n_batch, out_h, out_w):
    """(9, N*H*W) masks: 1 where the 3x3 tap's neighbor is in-bounds, else 0."""
    hw = out_h * out_w
    yy, xx = np.meshgrid(np.arange(out_h), np.arange(out_w), indexing="ij")
    masks = np.empty((9, n_batch * hw), dtype=np.float32)
    for t in range(9):
        dy, dx = t // 3 - 1, t % 3 - 1
        m = ((yy + dy >= 0) & (yy + dy < out_h) &
             (xx + dx >= 0) & (xx + dx < out_w)).astype(np.float32).reshape(hw)
        masks[t] = np.tile(m, n_batch)
    return masks


@jax.jit
def stack_decoder_forward(x_nchw, down_nchw, params):
    """StackDecoder.forward(x, down_tensor). Inputs/outputs are NCHW (PyTorch)."""
    n_batch, c_x, in_h, in_w = x_nchw.shape
    _, c_down, out_h, out_w = down_nchw.shape
    hw = out_h * out_w

    # Channels-in-sublane / spatial-in-lane layout: boundary conversions are
    # pure reshapes of the row-major NCHW buffers (no transposes).
    x_flat = x_nchw.reshape(n_batch * c_x, in_h * in_w)
    down_flat = down_nchw.reshape(n_batch, c_down, hw)

    m_t = jnp.asarray(_bilinear_matrix(in_h, in_w, out_h, out_w).T)   # (h*w, H*W)
    masks = jnp.asarray(_tap_masks(n_batch, out_h, out_w))            # (9, N*H*W)

    # Pre-reshape conv weights to transposed im2col slabs, BN params to (C, 1).
    flat_params = []
    cins = []
    prev_c = c_x + c_down
    for (w_hwio, gamma, beta) in params:
        kh, kw, cin, cout = w_hwio.shape
        assert (kh, kw) == (3, 3)
        # Activation re-use between layers is only safe when channels chain.
        assert cin == prev_c, "layer input channels must equal previous output"
        prev_c = cout
        cins.append(cin)
        flat_params += [
            w_hwio.reshape(kh * kw * cin, cout).T,                    # (Cout, 9*Cin)
            gamma.reshape(cout, 1).astype(jnp.float32),
            beta.reshape(cout, 1).astype(jnp.float32),
        ]
    c_y = params[-1][0].shape[-1]
    c0 = c_x + c_down

    # Scratch at these sizes: act 16 KiB + cols 144 KiB -- far inside any
    # generation's VMEM (incl. v7x's 64 MiB); the lane-dense layout avoids the
    # ~16-21x (8,128) tile-padding inflation of the old small-C NHWC layout.
    # TODO(synk): production-size H*W needs spatial (lane-axis) tiling with a
    # 1-row halo plus a two-pass / accumulated BN-stat reduction; that is also
    # what a "parallel" grid axis for v7x's two TensorCores would require.
    kernel = functools.partial(_stack_decoder_kernel, out_w=out_w)
    out = pl.pallas_call(
        kernel,
        out_shape=jax.ShapeDtypeStruct((n_batch, c_y, hw), jnp.float32),
        scratch_shapes=[
            pltpu.VMEM((c0, n_batch * hw), jnp.float32),              # concat act
            pltpu.VMEM((9 * max(cins), n_batch * hw), jnp.float32),   # im2col slab
        ],
    )(x_flat, down_flat, m_t, masks, *flat_params)

    return out.reshape(n_batch, c_y, out_h, out_w)                    # NCHW (reshape only)


# ----------------------------------------------------------------------------
# Pure-JAX reference (for correctness check)
# ----------------------------------------------------------------------------
def _bilinear_align_corners_ref(x_nhwc, out_h, out_w):
    n, h, w, c = x_nhwc.shape

    def coords(out_size, in_size):
        scale = (in_size - 1) / (out_size - 1) if out_size > 1 else 0.0
        f = jnp.arange(out_size, dtype=jnp.float32) * jnp.float32(scale)
        i0 = jnp.clip(jnp.floor(f).astype(jnp.int32), 0, in_size - 1)
        i1 = jnp.clip(i0 + 1, 0, in_size - 1)
        t = f - i0.astype(jnp.float32)
        return i0, i1, t

    y0, y1, ty = coords(out_h, h)
    x0, x1, tx = coords(out_w, w)
    r0 = x_nhwc[:, y0, :, :]
    r1 = x_nhwc[:, y1, :, :]
    rows = r0 * (1.0 - ty)[None, :, None, None] + r1 * ty[None, :, None, None]
    c0 = rows[:, :, x0, :]
    c1 = rows[:, :, x1, :]
    return c0 * (1.0 - tx)[None, None, :, None] + c1 * tx[None, None, :, None]


def _ref_conv_bn_relu(x, w, gamma, beta):
    y = lax.conv_general_dilated(
        x, w, window_strides=(1, 1), padding=((1, 1), (1, 1)),
        dimension_numbers=("NHWC", "HWIO", "NHWC"),
        precision=lax.Precision.HIGHEST,
        preferred_element_type=jnp.float32)
    mean = y.mean(axis=(0, 1, 2))
    var = ((y - mean) ** 2).mean(axis=(0, 1, 2))
    yn = (y - mean) * lax.rsqrt(var + BN_EPS) * gamma + beta
    return jnp.maximum(yn, 0.0)


def _ref_forward(x_nchw, down_nchw, params):
    _, _, H, W = down_nchw.shape
    x = jnp.transpose(x_nchw, (0, 2, 3, 1))
    down = jnp.transpose(down_nchw, (0, 2, 3, 1))
    x = _bilinear_align_corners_ref(x, H, W)
    x = jnp.concatenate([x, down], axis=-1)
    for (w_hwio, gamma, beta) in params:
        x = _ref_conv_bn_relu(x, w_hwio, gamma, beta)
    return jnp.transpose(x, (0, 3, 1, 2))


# ----------------------------------------------------------------------------
# Parameter init + main
# ----------------------------------------------------------------------------
def init_stack_decoder_params(key, x_big_channels, x_channels, y_channels, k=3):
    """Deterministic init. Returns list of (weight_HWIO, gamma, beta) per layer."""
    cins = [x_big_channels + x_channels, y_channels, y_channels]
    couts = [y_channels, y_channels, y_channels]
    params = []
    for cin, cout in zip(cins, couts):
        key, kw, kg, kb = jax.random.split(key, 4)
        # PyTorch conv weight is (Cout, Cin, kh, kw); store HWIO for the wrapper.
        w_oihw = 0.1 * jax.random.normal(kw, (cout, cin, k, k), dtype=jnp.float32)
        w_hwio = jnp.transpose(w_oihw, (2, 3, 1, 0))
        gamma = 1.0 + 0.1 * jax.random.normal(kg, (cout,), dtype=jnp.float32)
        beta = 0.1 * jax.random.normal(kb, (cout,), dtype=jnp.float32)
        params.append((w_hwio, gamma, beta))
    return params


if __name__ == "__main__":
    key = jax.random.PRNGKey(0)
    k_x, k_d, k_p = jax.random.split(key, 3)

    # StackDecoder(x_big_channels=4, x_channels=4, y_channels=8)
    x_big_channels, x_channels, y_channels = 4, 4, 8
    N = 2
    x = jax.random.normal(k_x, (N, x_big_channels, 8, 8), dtype=jnp.float32)          # deep feature
    down_tensor = jax.random.normal(k_d, (N, x_channels, 16, 16), dtype=jnp.float32)  # skip feature

    params = init_stack_decoder_params(k_p, x_big_channels, x_channels, y_channels)

    out = stack_decoder_forward(x, down_tensor, params)
    out = jax.block_until_ready(out)
    assert out.shape == (N, y_channels, 16, 16), out.shape

    ref = jax.block_until_ready(_ref_forward(x, down_tensor, params))
    max_err = float(jnp.max(jnp.abs(out - ref)))
    assert jnp.allclose(out, ref, rtol=2e-3, atol=2e-3), max_err

    print("KERNEL_OK")
</pallas_src>

<mosaic_0001>
module attributes {stable_mosaic.version = 11 : i64} {
  func.func @_stack_decoder_kernel(%arg0: memref<8x64xf32, #tpu.memory_space<vmem>>, %arg1: memref<2x4x256xf32, #tpu.memory_space<vmem>>, %arg2: memref<64x256xf32, #tpu.memory_space<vmem>>, %arg3: memref<9x512xf32, #tpu.memory_space<vmem>>, %arg4: memref<8x72xf32, #tpu.memory_space<vmem>>, %arg5: memref<8x1xf32, #tpu.memory_space<vmem>>, %arg6: memref<8x1xf32, #tpu.memory_space<vmem>>, %arg7: memref<8x72xf32, #tpu.memory_space<vmem>>, %arg8: memref<8x1xf32, #tpu.memory_space<vmem>>, %arg9: memref<8x1xf32, #tpu.memory_space<vmem>>, %arg10: memref<8x72xf32, #tpu.memory_space<vmem>>, %arg11: memref<8x1xf32, #tpu.memory_space<vmem>>, %arg12: memref<8x1xf32, #tpu.memory_space<vmem>>, %arg13: memref<2x8x256xf32, #tpu.memory_space<vmem>>, %arg14: memref<8x512xf32, #tpu.memory_space<vmem>>, %arg15: memref<72x512xf32, #tpu.memory_space<vmem>>) attributes {dimension_semantics = [], scalar_prefetch = 0 : i64, scratch_operands = 2 : i64, tpu.core_type = #tpu.core_type<tc>} {
    %c0 = arith.constant 0 : index
    %c0_0 = arith.constant 0 : index
    %0 = vector.load %arg0[%c0, %c0_0] : memref<8x64xf32, #tpu.memory_space<vmem>>, vector<8x64xf32>
    %c0_1 = arith.constant 0 : index
    %c0_2 = arith.constant 0 : index
    %1 = vector.load %arg2[%c0_1, %c0_2] : memref<64x256xf32, #tpu.memory_space<vmem>>, vector<64x256xf32>
    %cst = arith.constant dense<0.000000e+00> : vector<8x256xf32>
    %2 = tpu.matmul %0, %1, %cst {dimension_numbers = #tpu.dot_dimension_numbers<[1], [0], [0], [1], [0, 0, 1, 1], [], []>} : vector<8x64xf32>, vector<64x256xf32>, vector<8x256xf32> -> vector<8x256xf32>
    %3 = vector.extract_strided_slice %2 {offsets = [0, 0], sizes = [4, 256], strides = [1, 1]} : vector<8x256xf32> to vector<4x256xf32>
    %c0_3 = arith.constant 0 : index
    %c0_4 = arith.constant 0 : index
    %4 = vector.load %arg14[%c0_3, %c0_4] : memref<8x512xf32, #tpu.memory_space<vmem>>, vector<4x256xf32>
    tpu.vector_store %arg14[%c0_3, %c0_4], %3 {strides = array<i32>} : memref<8x512xf32, #tpu.memory_space<vmem>>, vector<4x256xf32>,
    %c0_5 = arith.constant 0 : index
    %c0_6 = arith.constant 0 : index
    %c0_7 = arith.constant 0 : index
    %5 = vector.load %arg1[%c0_5, %c0_6, %c0_7] : memref<2x4x256xf32, #tpu.memory_space<vmem>>, vector<1x4x256xf32>
    %6 = vector.shape_cast %5 : vector<1x4x256xf32> to vector<4x256xf32>
    %c4 = arith.constant 4 : index
    %c0_8 = arith.constant 0 : index
    %7 = vector.load %arg14[%c4, %c0_8] : memref<8x512xf32, #tpu.memory_space<vmem>>, vector<4x256xf32>
    tpu.vector_store %arg14[%c4, %c0_8], %6 {strides = array<i32>} : memref<8x512xf32, #tpu.memory_space<vmem>>, vector<4x256xf32>,
    %8 = vector.extract_strided_slice %2 {offsets = [4, 0], sizes = [4, 256], strides = [1, 1]} : vector<8x256xf32> to vector<4x256xf32>
    %c0_9 = arith.constant 0 : index
    %c256 = arith.constant 256 : index
    %9 = vector.load %arg14[%c0_9, %c256] : memref<8x512xf32, #tpu.memory_space<vmem>>, vector<4x256xf32>
    tpu.vector_store %arg14[%c0_9, %c256], %8 {strides = array<i32>} : memref<8x512xf32, #tpu.memory_space<vmem>>, vector<4x256xf32>,
    %c1 = arith.constant 1 : index
    %c0_10 = arith.constant 0 : index
    %c0_11 = arith.constant 0 : index
    %10 = vector.load %arg1[%c1, %c0_10, %c0_11] : memref<2x4x256xf32, #tpu.memory_space<vmem>>, vector<1x4x256xf32>
    %11 = vector.shape_cast %10 : vector<1x4x256xf32> to vector<4x256xf32>
    %c4_12 = arith.constant 4 : index
    %c256_13 = arith.constant 256 : index
    %12 = vector.load %arg14[%c4_12, %c256_13] : memref<8x512xf32, #tpu.memory_space<vmem>>, vector<4x256xf32>
    tpu.vector_store %arg14[%c4_12, %c256_13], %11 {strides = array<i32>} : memref<8x512xf32, #tpu.memory_space<vmem>>, vector<4x256xf32>,
    %c0_14 = arith.constant 0 : index
    %c0_15 = arith.constant 0 : index
    %13 = vector.load %arg3[%c0_14, %c0_15] : memref<9x512xf32, #tpu.memory_space<vmem>>, vector<1x512xf32>
    %c1_16 = arith.constant 1 : index
    %c0_17 = arith.constant 0 : index
    %14 = vector.load %arg3[%c1_16, %c0_17] : memref<9x512xf32, #tpu.memory_space<vmem>>, vector<1x512xf32>
    %c2 = arith.constant 2 : index
    %c0_18 = arith.constant 0 : index
    %15 = vector.load %arg3[%c2, %c0_18] : memref<9x512xf32, #tpu.memory_space<vmem>>, vector<1x512xf32>
    %c3 = arith.constant 3 : index
    %c0_19 = arith.constant 0 : index
    %16 = vector.load %arg3[%c3, %c0_19] : memref<9x512xf32, #tpu.memory_space<vmem>>, vector<1x512xf32>
    %c4_20 = arith.constant 4 : index
    %c0_21 = arith.constant 0 : index
    %17 = vector.load %arg3[%c4_20, %c0_21] : memref<9x512xf32, #tpu.memory_space<vmem>>, vector<1x512xf32>
    %c5 = arith.constant 5 : index
    %c0_22 = arith.constant 0 : index
    %18 = vector.load %arg3[%c5, %c0_22] : memref<9x512xf32, #tpu.memory_space<vmem>>, vector<1x512xf32>
    %c6 = arith.constant 6 : index
    %c0_23 = arith.constant 0 : index
    %19 = vector.load %arg3[%c6, %c0_23] : memref<9x512xf32, #tpu.memory_space<vmem>>, vector<1x512xf32>
    %c7 = arith.constant 7 : index
    %c0_24 = arith.constant 0 : index
    %20 = vector.load %arg3[%c7, %c0_24] : memref<9x512xf32, #tpu.memory_space<vmem>>, vector<1x512xf32>
    %c8 = arith.constant 8 : index
    %c0_25 = arith.constant 0 : index
    %21 = vector.load %arg3[%c8, %c0_25] : memref<9x512xf32, #tpu.memory_space<vmem>>, vector<1x512xf32>
    %c0_26 = arith.constant 0 : index
    %c0_27 = arith.constant 0 : index
    %22 = vector.load %arg14[%c0_26, %c0_27] : memref<8x512xf32, #tpu.memory_space<vmem>>, vector<8x512xf32>
    %c17_i32 = arith.constant 17 : i32
    %23 = tpu.dynamic_rotate %22 by %c17_i32 dim 1 : vector<8x512xf32>, i32 -> vector<8x512xf32>
    %24 = vector.broadcast %13 : vector<1x512xf32> to vector<8x512xf32>
    %25 = arith.mulf %23, %24 : vector<8x512xf32>
    %c0_28 = arith.constant 0 : index
    %c0_29 = arith.constant 0 : index
    %26 = vector.load %arg15[%c0_28, %c0_29] : memref<72x512xf32, #tpu.memory_space<vmem>>, vector<8x512xf32>
    tpu.vector_store %arg15[%c0_28, %c0_29], %25 {strides = array<i32>} : memref<72x512xf32, #tpu.memory_space<vmem>>, vector<8x512xf32>,
    %c16_i32 = arith.constant 16 : i32
    %27 = tpu.dynamic_rotate %22 by %c16_i32 dim 1 : vector<8x512xf32>, i32 -> vector<8x512xf32>
    %28 = vector.broadcast %14 : vector<1x512xf32> to vector<8x512xf32>
    %29 = arith.mulf %27, %28 : vector<8x512xf32>
    %c8_30 = arith.constant 8 : index
    %c0_31 = arith.constant 0 : index
    %30 = vector.load %arg15[%c8_30, %c0_31] : memref<72x512xf32, #tpu.memory_space<vmem>>, vector<8x512xf32>
    tpu.vector_store %arg15[%c8_30, %c0_31], %29 {strides = array<i32>} : memref<72x512xf32, #tpu.memory_space<vmem>>, vector<8x512xf32>,
    %c15_i32 = arith.constant 15 : i32
    %31 = tpu.dynamic_rotate %22 by %c15_i32 dim 1 : vector<8x512xf32>, i32 -> vector<8x512xf32>
    %32 = vector.broadcast %15 : vector<1x512xf32> to vector<8x512xf32>
    %33 = arith.mulf %31, %32 : vector<8x512xf32>
    %c16 = arith.constant 16 : index
    %c0_32 = arith.constant 0 : index
    %34 = vector.load %arg15[%c16, %c0_32] : memref<72x512xf32, #tpu.memory_space<vmem>>, vector<8x512xf32>
    tpu.vector_store %arg15[%c16, %c0_32], %33 {strides = array<i32>} : memref<72x512xf32, #tpu.memory_space<vmem>>, vector<8x512xf32>,
    %c1_i32 = arith.constant 1 : i32
    %35 = tpu.dynamic_rotate %22 by %c1_i32 dim 1 : vector<8x512xf32>, i32 -> vector<8x512xf32>
    %36 = vector.broadcast %16 : vector<1x512xf32> to vector<8x512xf32>
    %37 = arith.mulf %35, %36 : vector<8x512xf32>
    %c24 = arith.constant 24 : index
    %c0_33 = arith.constant 0 : index
    %38 = vector.load %arg15[%c24, %c0_33] : memref<72x512xf32, #tpu.memory_space<vmem>>, vector<8x512xf32>
    tpu.vector_store %arg15[%c24, %c0_33], %37 {strides = array<i32>} : memref<72x512xf32, #tpu.memory_space<vmem>>, vector<8x512xf32>,
    %39 = vector.broadcast %17 : vector<1x512xf32> to vector<8x512xf32>
    %40 = arith.mulf %22, %39 : vector<8x512xf32>
    %c32 = arith.constant 32 : index
    %c0_34 = arith.constant 0 : index
    %41 = vector.load %arg15[%c32, %c0_34] : memref<72x512xf32, #tpu.memory_space<vmem>>, vector<8x512xf32>
    tpu.vector_store %arg15[%c32, %c0_34], %40 {strides = array<i32>} : memref<72x512xf32, #tpu.memory_space<vmem>>, vector<8x512xf32>,
    %c511_i32 = arith.constant 511 : i32
    %42 = tpu.dynamic_rotate %22 by %c511_i32 dim 1 : vector<8x512xf32>, i32 -> vector<8x512xf32>
    %43 = vector.broadcast %18 : vector<1x512xf32> to vector<8x512xf32>
    %44 = arith.mulf %42, %43 : vector<8x512xf32>
    %c40 = arith.constant 40 : index
    %c0_35 = arith.constant 0 : index
    %45 = vector.load %arg15[%c40, %c0_35] : memref<72x512xf32, #tpu.memory_space<vmem>>, vector<8x512xf32>
    tpu.vector_store %arg15[%c40, %c0_35], %44 {strides = array<i32>} : memref<72x512xf32, #tpu.memory_space<vmem>>, vector<8x512xf32>,
    %c497_i32 = arith.constant 497 : i32
    %46 = tpu.dynamic_rotate %22 by %c497_i32 dim 1 : vector<8x512xf32>, i32 -> vector<8x512xf32>
    %47 = vector.broadcast %19 : vector<1x512xf32> to vector<8x512xf32>
    %48 = arith.mulf %46, %47 : vector<8x512xf32>
    %c48 = arith.constant 48 : index
    %c0_36 = arith.constant 0 : index
    %49 = vector.load %arg15[%c48, %c0_36] : memref<72x512xf32, #tpu.memory_space<vmem>>, vector<8x512xf32>
    tpu.vector_store %arg15[%c48, %c0_36], %48 {strides = array<i32>} : memref<72x512xf32, #tpu.memory_space<vmem>>, vector<8x512xf32>,
    %c496_i32 = arith.constant 496 : i32
    %50 = tpu.dynamic_rotate %22 by %c496_i32 dim 1 : vector<8x512xf32>, i32 -> vector<8x512xf32>
    %51 = vector.broadcast %20 : vector<1x512xf32> to vector<8x512xf32>
    %52 = arith.mulf %50, %51 : vector<8x512xf32>
    %c56 = arith.constant 56 : index
    %c0_37 = arith.constant 0 : index
    %53 = vector.load %arg15[%c56, %c0_37] : memref<72x512xf32, #tpu.memory_space<vmem>>, vector<8x512xf32>
    tpu.vector_store %arg15[%c56, %c0_37], %52 {strides = array<i32>} : memref<72x512xf32, #tpu.memory_space<vmem>>, vector<8x512xf32>,
    %c495_i32 = arith.constant 495 : i32
    %54 = tpu.dynamic_rotate %22 by %c495_i32 dim 1 : vector<8x512xf32>, i32 -> vector<8x512xf32>
    %55 = vector.broadcast %21 : vector<1x512xf32> to vector<8x512xf32>
    %56 = arith.mulf %54, %55 : vector<8x512xf32>
    %c64 = arith.constant 64 : index
    %c0_38 = arith.constant 0 : index
    %57 = vector.load %arg15[%c64, %c0_38] : memref<72x512xf32, #tpu.memory_space<vmem>>, vector<8x512xf32>
    tpu.vector_store %arg15[%c64, %c0_38], %56 {strides = array<i32>} : memref<72x512xf32, #tpu.memory_space<vmem>>, vector<8x512xf32>,
    %c0_39 = arith.constant 0 : index
    %c0_40 = arith.constant 0 : index
    %58 = vector.load %arg4[%c0_39, %c0_40] : memref<8x72xf32, #tpu.memory_space<vmem>>, vector<8x72xf32>
    %c0_41 = arith.constant 0 : index
    %c0_42 = arith.constant 0 : index
    %59 = vector.load %arg15[%c0_41, %c0_42] : memref<72x512xf32, #tpu.memory_space<vmem>>, vector<72x512xf32>
    %cst_43 = arith.constant dense<0.000000e+00> : vector<8x512xf32>
    %60 = tpu.matmul %58, %59, %cst_43 {dimension_numbers = #tpu.dot_dimension_numbers<[1], [0], [0], [1], [0, 0, 1, 1], [], []>} : vector<8x72xf32>, vector<72x512xf32>, vector<8x512xf32> -> vector<8x512xf32>
    %cst_44 = arith.constant dense<0.000000e+00> : vector<8xf32>
    %61 = vector.multi_reduction <add>, %60, %cst_44 [1] : vector<8x512xf32> to vector<8xf32>
    %62 = vector.shape_cast %61 : vector<8xf32> to vector<8x1xf32>
    %cst_45 = arith.constant 0.001953125 : f32
    %63 = vector.broadcast %cst_45 : f32 to vector<8x1xf32>
    %64 = arith.mulf %62, %63 : vector<8x1xf32>
    %65 = vector.broadcast %64 : vector<8x1xf32> to vector<8x512xf32>
    %66 = arith.subf %60, %65 : vector<8x512xf32>
    %67 = arith.mulf %66, %66 : vector<8x512xf32>
    %cst_46 = arith.constant dense<0.000000e+00> : vector<8xf32>
    %68 = vector.multi_reduction <add>, %67, %cst_46 [1] : vector<8x512xf32> to vector<8xf32>
    %69 = vector.shape_cast %68 : vector<8xf32> to vector<8x1xf32>
    %cst_47 = arith.constant 0.001953125 : f32
    %70 = vector.broadcast %cst_47 : f32 to vector<8x1xf32>
    %71 = arith.mulf %69, %70 : vector<8x1xf32>
    %cst_48 = arith.constant 9.99999974E-5 : f32
    %72 = vector.broadcast %cst_48 : f32 to vector<8x1xf32>
    %73 = arith.addf %71, %72 : vector<8x1xf32>
    %74 = math.rsqrt %73 : vector<8x1xf32>
    %c0_49 = arith.constant 0 : index
    %c0_50 = arith.constant 0 : index
    %75 = vector.load %arg5[%c0_49, %c0_50] : memref<8x1xf32, #tpu.memory_space<vmem>>, vector<8x1xf32>
    %76 = arith.mulf %74, %75 : vector<8x1xf32>
    %77 = vector.broadcast %76 : vector<8x1xf32> to vector<8x512xf32>
    %78 = arith.mulf %66, %77 : vector<8x512xf32>
    %c0_51 = arith.constant 0 : index
    %c0_52 = arith.constant 0 : index
    %79 = vector.load %arg6[%c0_51, %c0_52] : memref<8x1xf32, #tpu.memory_space<vmem>>, vector<8x1xf32>
    %80 = vector.broadcast %79 : vector<8x1xf32> to vector<8x512xf32>
    %81 = arith.addf %78, %80 : vector<8x512xf32>
    %cst_53 = arith.constant 0.000000e+00 : f32
    %82 = vector.broadcast %cst_53 : f32 to vector<8x512xf32>
    %83 = arith.maximumf %81, %82 : vector<8x512xf32>
    %c17_i32_54 = arith.constant 17 : i32
    %84 = tpu.dynamic_rotate %83 by %c17_i32_54 dim 1 : vector<8x512xf32>, i32 -> vector<8x512xf32>
    %85 = vector.broadcast %13 : vector<1x512xf32> to vector<8x512xf32>
    %86 = arith.mulf %84, %85 : vector<8x512xf32>
    %c0_55 = arith.constant 0 : index
    %c0_56 = arith.constant 0 : index
    %87 = vector.load %arg15[%c0_55, %c0_56] : memref<72x512xf32, #tpu.memory_space<vmem>>, vector<8x512xf32>
    tpu.vector_store %arg15[%c0_55, %c0_56], %86 {strides = array<i32>} : memref<72x512xf32, #tpu.memory_space<vmem>>, vector<8x512xf32>,
    %c16_i32_57 = arith.constant 16 : i32
    %88 = tpu.dynamic_rotate %83 by %c16_i32_57 dim 1 : vector<8x512xf32>, i32 -> vector<8x512xf32>
    %89 = vector.broadcast %14 : vector<1x512xf32> to vector<8x512xf32>
    %90 = arith.mulf %88, %89 : vector<8x512xf32>
    %c8_58 = arith.constant 8 : index
    %c0_59 = arith.constant 0 : index
    %91 = vector.load %arg15[%c8_58, %c0_59] : memref<72x512xf32, #tpu.memory_space<vmem>>, vector<8x512xf32>
    tpu.vector_store %arg15[%c8_58, %c0_59], %90 {strides = array<i32>} : memref<72x512xf32, #tpu.memory_space<vmem>>, vector<8x512xf32>,
    %c15_i32_60 = arith.constant 15 : i32
    %92 = tpu.dynamic_rotate %83 by %c15_i32_60 dim 1 : vector<8x512xf32>, i32 -> vector<8x512xf32>
    %93 = vector.broadcast %15 : vector<1x512xf32> to vector<8x512xf32>
    %94 = arith.mulf %92, %93 : vector<8x512xf32>
    %c16_61 = arith.constant 16 : index
    %c0_62 = arith.constant 0 : index
    %95 = vector.load %arg15[%c16_61, %c0_62] : memref<72x512xf32, #tpu.memory_space<vmem>>, vector<8x512xf32>
    tpu.vector_store %arg15[%c16_61, %c0_62], %94 {strides = array<i32>} : memref<72x512xf32, #tpu.memory_space<vmem>>, vector<8x512xf32>,
    %c1_i32_63 = arith.constant 1 : i32
    %96 = tpu.dynamic_rotate %83 by %c1_i32_63 dim 1 : vector<8x512xf32>, i32 -> vector<8x512xf32>
    %97 = vector.broadcast %16 : vector<1x512xf32> to vector<8x512xf32>
    %98 = arith.mulf %96, %97 : vector<8x512xf32>
    %c24_64 = arith.constant 24 : index
    %c0_65 = arith.constant 0 : index
    %99 = vector.load %arg15[%c24_64, %c0_65] : memref<72x512xf32, #tpu.memory_space<vmem>>, vector<8x512xf32>
    tpu.vector_store %arg15[%c24_64, %c0_65], %98 {strides = array<i32>} : memref<72x512xf32, #tpu.memory_space<vmem>>, vector<8x512xf32>,
    %100 = vector.broadcast %17 : vector<1x512xf32> to vector<8x512xf32>
    %101 = arith.mulf %83, %100 : vector<8x512xf32>
    %c32_66 = arith.constant 32 : index
    %c0_67 = arith.constant 0 : index
    %102 = vector.load %arg15[%c32_66, %c0_67] : memref<72x512xf32, #tpu.memory_space<vmem>>, vector<8x512xf32>
    tpu.vector_store %arg15[%c32_66, %c0_67], %101 {strides = array<i32>} : memref<72x512xf32, #tpu.memory_space<vmem>>, vector<8x512xf32>,
    %c511_i32_68 = arith.constant 511 : i32
    %103 = tpu.dynamic_rotate %83 by %c511_i32_68 dim 1 : vector<8x512xf32>, i32 -> vector<8x512xf32>
    %104 = vector.broadcast %18 : vector<1x512xf32> to vector<8x512xf32>
    %105 = arith.mulf %103, %104 : vector<8x512xf32>
    %c40_69 = arith.constant 40 : index
    %c0_70 = arith.constant 0 : index
    %106 = vector.load %arg15[%c40_69, %c0_70] : memref<72x512xf32, #tpu.memory_space<vmem>>, vector<8x512xf32>
    tpu.vector_store %arg15[%c40_69, %c0_70], %105 {strides = array<i32>} : memref<72x512xf32, #tpu.memory_space<vmem>>, vector<8x512xf32>,
    %c497_i32_71 = arith.constant 497 : i32
    %107 = tpu.dynamic_rotate %83 by %c497_i32_71 dim 1 : vector<8x512xf32>, i32 -> vector<8x512xf32>
    %108 = vector.broadcast %19 : vector<1x512xf32> to vector<8x512xf32>
    %109 = arith.mulf %107, %108 : vector<8x512xf32>
    %c48_72 = arith.constant 48 : index
    %c0_73 = arith.constant 0 : index
    %110 = vector.load %arg15[%c48_72, %c0_73] : memref<72x512xf32, #tpu.memory_space<vmem>>, vector<8x512xf32>
    tpu.vector_store %arg15[%c48_72, %c0_73], %109 {strides = array<i32>} : memref<72x512xf32, #tpu.memory_space<vmem>>, vector<8x512xf32>,
    %c496_i32_74 = arith.constant 496 : i32
    %111 = tpu.dynamic_rotate %83 by %c496_i32_74 dim 1 : vector<8x512xf32>, i32 -> vector<8x512xf32>
    %112 = vector.broadcast %20 : vector<1x512xf32> to vector<8x512xf32>
    %113 = arith.mulf %111, %112 : vector<8x512xf32>
    %c56_75 = arith.constant 56 : index
    %c0_76 = arith.constant 0 : index
    %114 = vector.load %arg15[%c56_75, %c0_76] : memref<72x512xf32, #tpu.memory_space<vmem>>, vector<8x512xf32>
    tpu.vector_store %arg15[%c56_75, %c0_76], %113 {strides = array<i32>} : memref<72x512xf32, #tpu.memory_space<vmem>>, vector<8x512xf32>,
    %c495_i32_77 = arith.constant 495 : i32
    %115 = tpu.dynamic_rotate %83 by %c495_i32_77 dim 1 : vector<8x512xf32>, i32 -> vector<8x512xf32>
    %116 = vector.broadcast %21 : vector<1x512xf32> to vector<8x512xf32>
    %117 = arith.mulf %115, %116 : vector<8x512xf32>
    %c64_78 = arith.constant 64 : index
    %c0_79 = arith.constant 0 : index
    %118 = vector.load %arg15[%c64_78, %c0_79] : memref<72x512xf32, #tpu.memory_space<vmem>>, vector<8x512xf32>
    tpu.vector_store %arg15[%c64_78, %c0_79], %117 {strides = array<i32>} : memref<72x512xf32, #tpu.memory_space<vmem>>, vector<8x512xf32>,
    %c0_80 = arith.constant 0 : index
    %c0_81 = arith.constant 0 : index
    %119 = vector.load %arg7[%c0_80, %c0_81] : memref<8x72xf32, #tpu.memory_space<vmem>>, vector<8x72xf32>
    %c0_82 = arith.constant 0 : index
    %c0_83 = arith.constant 0 : index
    %120 = vector.load %arg15[%c0_82, %c0_83] : memref<72x512xf32, #tpu.memory_space<vmem>>, vector<72x512xf32>
    %cst_84 = arith.constant dense<0.000000e+00> : vector<8x512xf32>
    %121 = tpu.matmul %119, %120, %cst_84 {dimension_numbers = #tpu.dot_dimension_numbers<[1], [0], [0], [1], [0, 0, 1, 1], [], []>} : vector<8x72xf32>, vector<72x512xf32>, vector<8x512xf32> -> vector<8x512xf32>
    %cst_85 = arith.constant dense<0.000000e+00> : vector<8xf32>
    %122 = vector.multi_reduction <add>, %121, %cst_85 [1] : vector<8x512xf32> to vector<8xf32>
    %123 = vector.shape_cast %122 : vector<8xf32> to vector<8x1xf32>
    %cst_86 = arith.constant 0.001953125 : f32
    %124 = vector.broadcast %cst_86 : f32 to vector<8x1xf32>
    %125 = arith.mulf %123, %124 : vector<8x1xf32>
    %126 = vector.broadcast %125 : vector<8x1xf32> to vector<8x512xf32>
    %127 = arith.subf %121, %126 : vector<8x512xf32>
    %128 = arith.mulf %127, %127 : vector<8x512xf32>
    %cst_87 = arith.constant dense<0.000000e+00> : vector<8xf32>
    %129 = vector.multi_reduction <add>, %128, %cst_87 [1] : vector<8x512xf32> to vector<8xf32>
    %130 = vector.shape_cast %129 : vector<8xf32> to vector<8x1xf32>
    %cst_88 = arith.constant 0.001953125 : f32
    %131 = vector.broadcast %cst_88 : f32 to vector<8x1xf32>
    %132 = arith.mulf %130, %131 : vector<8x1xf32>
    %cst_89 = arith.constant 9.99999974E-5 : f32
    %133 = vector.broadcast %cst_89 : f32 to vector<8x1xf32>
    %134 = arith.addf %132, %133 : vector<8x1xf32>
    %135 = math.rsqrt %134 : vector<8x1xf32>
    %c0_90 = arith.constant 0 : index
    %c0_91 = arith.constant 0 : index
    %136 = vector.load %arg8[%c0_90, %c0_91] : memref<8x1xf32, #tpu.memory_space<vmem>>, vector<8x1xf32>
    %137 = arith.mulf %135, %136 : vector<8x1xf32>
    %138 = vector.broadcast %137 : vector<8x1xf32> to vector<8x512xf32>
    %139 = arith.mulf %127, %138 : vector<8x512xf32>
    %c0_92 = arith.constant 0 : index
    %c0_93 = arith.constant 0 : index
    %140 = vector.load %arg9[%c0_92, %c0_93] : memref<8x1xf32, #tpu.memory_space<vmem>>, vector<8x1xf32>
    %141 = vector.broadcast %140 : vector<8x1xf32> to vector<8x512xf32>
    %142 = arith.addf %139, %141 : vector<8x512xf32>
    %cst_94 = arith.constant 0.000000e+00 : f32
    %143 = vector.broadcast %cst_94 : f32 to vector<8x512xf32>
    %144 = arith.maximumf %142, %143 : vector<8x512xf32>
    %c17_i32_95 = arith.constant 17 : i32
    %145 = tpu.dynamic_rotate %144 by %c17_i32_95 dim 1 : vector<8x512xf32>, i32 -> vector<8x512xf32>
    %146 = vector.broadcast %13 : vector<1x512xf32> to vector<8x512xf32>
    %147 = arith.mulf %145, %146 : vector<8x512xf32>
    %c0_96 = arith.constant 0 : index
    %c0_97 = arith.constant 0 : index
    %148 = vector.load %arg15[%c0_96, %c0_97] : memref<72x512xf32, #tpu.memory_space<vmem>>, vector<8x512xf32>
    tpu.vector_store %arg15[%c0_96, %c0_97], %147 {strides = array<i32>} : memref<72x512xf32, #tpu.memory_space<vmem>>, vector<8x512xf32>,
    %c16_i32_98 = arith.constant 16 : i32
    %149 = tpu.dynamic_rotate %144 by %c16_i32_98 dim 1 : vector<8x512xf32>, i32 -> vector<8x512xf32>
    %150 = vector.broadcast %14 : vector<1x512xf32> to vector<8x512xf32>
    %151 = arith.mulf %149, %150 : vector<8x512xf32>
    %c8_99 = arith.constant 8 : index
    %c0_100 = arith.constant 0 : index
    %152 = vector.load %arg15[%c8_99, %c0_100] : memref<72x512xf32, #tpu.memory_space<vmem>>, vector<8x512xf32>
    tpu.vector_store %arg15[%c8_99, %c0_100], %151 {strides = array<i32>} : memref<72x512xf32, #tpu.memory_space<vmem>>, vector<8x512xf32>,
    %c15_i32_101 = arith.constant 15 : i32
    %153 = tpu.dynamic_rotate %144 by %c15_i32_101 dim 1 : vector<8x512xf32>, i32 -> vector<8x512xf32>
    %154 = vector.broadcast %15 : vector<1x512xf32> to vector<8x512xf32>
    %155 = arith.mulf %153, %154 : vector<8x512xf32>
    %c16_102 = arith.constant 16 : index
    %c0_103 = arith.constant 0 : index
    %156 = vector.load %arg15[%c16_102, %c0_103] : memref<72x512xf32, #tpu.memory_space<vmem>>, vector<8x512xf32>
    tpu.vector_store %arg15[%c16_102, %c0_103], %155 {strides = array<i32>} : memref<72x512xf32, #tpu.memory_space<vmem>>, vector<8x512xf32>,
    %c1_i32_104 = arith.constant 1 : i32
    %157 = tpu.dynamic_rotate %144 by %c1_i32_104 dim 1 : vector<8x512xf32>, i32 -> vector<8x512xf32>
    %158 = vector.broadcast %16 : vector<1x512xf32> to vector<8x512xf32>
    %159 = arith.mulf %157, %158 : vector<8x512xf32>
    %c24_105 = arith.constant 24 : index
    %c0_106 = arith.constant 0 : index
    %160 = vector.load %arg15[%c24_105, %c0_106] : memref<72x512xf32, #tpu.memory_space<vmem>>, vector<8x512xf32>
    tpu.vector_store %arg15[%c24_105, %c0_106], %159 {strides = array<i32>} : memref<72x512xf32, #tpu.memory_space<vmem>>, vector<8x512xf32>,
    %161 = vector.broadcast %17 : vector<1x512xf32> to vector<8x512xf32>
    %162 = arith.mulf %144, %161 : vector<8x512xf32>
    %c32_107 = arith.constant 32 : index
    %c0_108 = arith.constant 0 : index
    %163 = vector.load %arg15[%c32_107, %c0_108] : memref<72x512xf32, #tpu.memory_space<vmem>>, vector<8x512xf32>
    tpu.vector_store %arg15[%c32_107, %c0_108], %162 {strides = array<i32>} : memref<72x512xf32, #tpu.memory_space<vmem>>, vector<8x512xf32>,
    %c511_i32_109 = arith.constant 511 : i32
    %164 = tpu.dynamic_rotate %144 by %c511_i32_109 dim 1 : vector<8x512xf32>, i32 -> vector<8x512xf32>
    %165 = vector.broadcast %18 : vector<1x512xf32> to vector<8x512xf32>
    %166 = arith.mulf %164, %165 : vector<8x512xf32>
    %c40_110 = arith.constant 40 : index
    %c0_111 = arith.constant 0 : index
    %167 = vector.load %arg15[%c40_110, %c0_111] : memref<72x512xf32, #tpu.memory_space<vmem>>, vector<8x512xf32>
    tpu.vector_store %arg15[%c40_110, %c0_111], %166 {strides = array<i32>} : memref<72x512xf32, #tpu.memory_space<vmem>>, vector<8x512xf32>,
    %c497_i32_112 = arith.constant 497 : i32
    %168 = tpu.dynamic_rotate %144 by %c497_i32_112 dim 1 : vector<8x512xf32>, i32 -> vector<8x512xf32>
    %169 = vector.broadcast %19 : vector<1x512xf32> to vector<8x512xf32>
    %170 = arith.mulf %168, %169 : vector<8x512xf32>
    %c48_113 = arith.constant 48 : index
    %c0_114 = arith.constant 0 : index
    %171 = vector.load %arg15[%c48_113, %c0_114] : memref<72x512xf32, #tpu.memory_space<vmem>>, vector<8x512xf32>
    tpu.vector_store %arg15[%c48_113, %c0_114], %170 {strides = array<i32>} : memref<72x512xf32, #tpu.memory_space<vmem>>, vector<8x512xf32>,
    %c496_i32_115 = arith.constant 496 : i32
    %172 = tpu.dynamic_rotate %144 by %c496_i32_115 dim 1 : vector<8x512xf32>, i32 -> vector<8x512xf32>
    %173 = vector.broadcast %20 : vector<1x512xf32> to vector<8x512xf32>
    %174 = arith.mulf %172, %173 : vector<8x512xf32>
    %c56_116 = arith.constant 56 : index
    %c0_117 = arith.constant 0 : index
    %175 = vector.load %arg15[%c56_116, %c0_117] : memref<72x512xf32, #tpu.memory_space<vmem>>, vector<8x512xf32>
    tpu.vector_store %arg15[%c56_116, %c0_117], %174 {strides = array<i32>} : memref<72x512xf32, #tpu.memory_space<vmem>>, vector<8x512xf32>,
    %c495_i32_118 = arith.constant 495 : i32
    %176 = tpu.dynamic_rotate %144 by %c495_i32_118 dim 1 : vector<8x512xf32>, i32 -> vector<8x512xf32>
    %177 = vector.broadcast %21 : vector<1x512xf32> to vector<8x512xf32>
    %178 = arith.mulf %176, %177 : vector<8x512xf32>
    %c64_119 = arith.constant 64 : index
    %c0_120 = arith.constant 0 : index
    %179 = vector.load %arg15[%c64_119, %c0_120] : memref<72x512xf32, #tpu.memory_space<vmem>>, vector<8x512xf32>
    tpu.vector_store %arg15[%c64_119, %c0_120], %178 {strides = array<i32>} : memref<72x512xf32, #tpu.memory_space<vmem>>, vector<8x512xf32>,
    %c0_121 = arith.constant 0 : index
    %c0_122 = arith.constant 0 : index
    %180 = vector.load %arg10[%c0_121, %c0_122] : memref<8x72xf32, #tpu.memory_space<vmem>>, vector<8x72xf32>
    %c0_123 = arith.constant 0 : index
    %c0_124 = arith.constant 0 : index
    %181 = vector.load %arg15[%c0_123, %c0_124] : memref<72x512xf32, #tpu.memory_space<vmem>>, vector<72x512xf32>
    %cst_125 = arith.constant dense<0.000000e+00> : vector<8x512xf32>
    %182 = tpu.matmul %180, %181, %cst_125 {dimension_numbers = #tpu.dot_dimension_numbers<[1], [0], [0], [1], [0, 0, 1, 1], [], []>} : vector<8x72xf32>, vector<72x512xf32>, vector<8x512xf32> -> vector<8x512xf32>
    %cst_126 = arith.constant dense<0.000000e+00> : vector<8xf32>
    %183 = vector.multi_reduction <add>, %182, %cst_126 [1] : vector<8x512xf32> to vector<8xf32>
    %184 = vector.shape_cast %183 : vector<8xf32> to vector<8x1xf32>
    %cst_127 = arith.constant 0.001953125 : f32
    %185 = vector.broadcast %cst_127 : f32 to vector<8x1xf32>
    %186 = arith.mulf %184, %185 : vector<8x1xf32>
    %187 = vector.broadcast %186 : vector<8x1xf32> to vector<8x512xf32>
    %188 = arith.subf %182, %187 : vector<8x512xf32>
    %189 = arith.mulf %188, %188 : vector<8x512xf32>
    %cst_128 = arith.constant dense<0.000000e+00> : vector<8xf32>
    %190 = vector.multi_reduction <add>, %189, %cst_128 [1] : vector<8x512xf32> to vector<8xf32>
    %191 = vector.shape_cast %190 : vector<8xf32> to vector<8x1xf32>
    %cst_129 = arith.constant 0.001953125 : f32
    %192 = vector.broadcast %cst_129 : f32 to vector<8x1xf32>
    %193 = arith.mulf %191, %192 : vector<8x1xf32>
    %cst_130 = arith.constant 9.99999974E-5 : f32
    %194 = vector.broadcast %cst_130 : f32 to vector<8x1xf32>
    %195 = arith.addf %193, %194 : vector<8x1xf32>
    %196 = math.rsqrt %195 : vector<8x1xf32>
    %c0_131 = arith.constant 0 : index
    %c0_132 = arith.constant 0 : index
    %197 = vector.load %arg11[%c0_131, %c0_132] : memref<8x1xf32, #tpu.memory_space<vmem>>, vector<8x1xf32>
    %198 = arith.mulf %196, %197 : vector<8x1xf32>
    %199 = vector.broadcast %198 : vector<8x1xf32> to vector<8x512xf32>
    %200 = arith.mulf %188, %199 : vector<8x512xf32>
    %c0_133 = arith.constant 0 : index
    %c0_134 = arith.constant 0 : index
    %201 = vector.load %arg12[%c0_133, %c0_134] : memref<8x1xf32, #tpu.memory_space<vmem>>, vector<8x1xf32>
    %202 = vector.broadcast %201 : vector<8x1xf32> to vector<8x512xf32>
    %203 = arith.addf %200, %202 : vector<8x512xf32>
    %cst_135 = arith.constant 0.000000e+00 : f32
    %204 = vector.broadcast %cst_135 : f32 to vector<8x512xf32>
    %205 = arith.maximumf %203, %204 : vector<8x512xf32>
    %206 = vector.extract_strided_slice %205 {offsets = [0, 0], sizes = [8, 256], strides = [1, 1]} : vector<8x512xf32> to vector<8x256xf32>
    %c0_136 = arith.constant 0 : index
    %c0_137 = arith.constant 0 : index
    %c0_138 = arith.constant 0 : index
    %207 = vector.load %arg13[%c0_136, %c0_137, %c0_138] : memref<2x8x256xf32, #tpu.memory_space<vmem>>, vector<1x8x256xf32>
    %208 = vector.shape_cast %207 : vector<1x8x256xf32> to vector<8x256xf32>
    %209 = vector.shape_cast %206 : vector<8x256xf32> to vector<1x8x256xf32>
    tpu.vector_store %arg13[%c0_136, %c0_137, %c0_138], %209 {strides = array<i32>} : memref<2x8x256xf32, #tpu.memory_space<vmem>>, vector<1x8x256xf32>,
    %210 = vector.extract_strided_slice %205 {offsets = [0, 256], sizes = [8, 256], strides = [1, 1]} : vector<8x512xf32> to vector<8x256xf32>
    %c1_139 = arith.constant 1 : index
    %c0_140 = arith.constant 0 : index
    %c0_141 = arith.constant 0 : index
    %211 = vector.load %arg13[%c1_139, %c0_140, %c0_141] : memref<2x8x256xf32, #tpu.memory_space<vmem>>, vector<1x8x256xf32>
    %212 = vector.shape_cast %211 : vector<1x8x256xf32> to vector<8x256xf32>
    %213 = vector.shape_cast %210 : vector<8x256xf32> to vector<1x8x256xf32>
    tpu.vector_store %arg13[%c1_139, %c0_140, %c0_141], %213 {strides = array<i32>} : memref<2x8x256xf32, #tpu.memory_space<vmem>>, vector<1x8x256xf32>,
    return
  }
}

</mosaic_0001>

<llo_original>
// kernel: stack_decoder_forward.1
$region0: #{stack_decoder_forward.1}
  #allocation0 [shape = 'u32[]', space=smem, size = 0x4, offset = 0x4, fixed_abs, tag = 'smem constant byte address 0x4 - core index']
  #allocation1 [shape = 'u32[72,128]{1,0:T(1,128)}', space=vmem, size = 0x9000, scoped, tag = 'internal scratch']
  #allocation2 [shape = 'f32[8,512]{1,0:T(8,128)}', space=vmem, size = 0x4000, scoped, tag = 'scratch operand']
  #allocation3 [shape = 'f32[72,512]{1,0:T(8,128)}', space=vmem, size = 0x24000, scoped, tag = 'scratch operand']
  %s0 = inlined_call_operand.vmem [shape: f32[8,64], index: 0, kind: input, shape index: {}]
  %s1 = inlined_call_operand.vmem [shape: f32[2,4,256], index: 1, kind: input, shape index: {}]
  %s2 = inlined_call_operand.vmem [shape: f32[64,256], index: 2, kind: input, shape index: {}]
  %s3 = inlined_call_operand.hbm [shape: f32[9,512], index: 3, kind: input, shape index: {}]
  %s4 = inlined_call_operand.vmem [shape: f32[8,72], index: 4, kind: input, shape index: {}]
  %s5 = inlined_call_operand.vmem [shape: f32[8,1], index: 5, kind: input, shape index: {}]
  %s6 = inlined_call_operand.vmem [shape: f32[8,1], index: 6, kind: input, shape index: {}]
  %s7 = inlined_call_operand.vmem [shape: f32[8,72], index: 7, kind: input, shape index: {}]
  %s8 = inlined_call_operand.vmem [shape: f32[8,1], index: 8, kind: input, shape index: {}]
  %s9 = inlined_call_operand.vmem [shape: f32[8,1], index: 9, kind: input, shape index: {}]
  %s10 = inlined_call_operand.vmem [shape: f32[8,72], index: 10, kind: input, shape index: {}]
  %s11 = inlined_call_operand.vmem [shape: f32[8,1], index: 11, kind: input, shape index: {}]
  %s12 = inlined_call_operand.vmem [shape: f32[8,1], index: 12, kind: input, shape index: {}]
  %s13 = inlined_call_operand.vmem [shape: f32[2,8,256], index: 13, kind: output, shape index: {}]
  %s14 = sld [smem:[#allocation0]]
  $region66: #{stack_decoder_forward.1} parent=0
    _
  %s16 = ssub.s32 1, %s14
  %s17 = scalar_select 0, %s16, %s14
  $region1: #{stack_decoder_forward.1} parent=0
    #allocation4 [shape = 'u8[32768]{0}', space=vmem, size = 0x8000, scoped, tag = 'input window, operand 3, single buffered']
    #allocation5 [shape = 's32[1]{0}', space=sflag, size = 0x4, scoped, tag = 'scoped memory for stack_decoder_forward.1']
    %18 = vsyncpa [#allocation5], 0
    // Predicated region
    $region2: #{stack_decoder_forward.1} parent=1 // pred_check
      _
    $region3: #{stack_decoder_forward.1} parent=1 // pred_check_branch
      %20 = sbr.rel (0) target = $region5
    $region4: #{stack_decoder_forward.1} parent=1 // pred_region
      _
    $region5: #{stack_decoder_forward.1} parent=1 // pred_fallthru
      _
    // Predicated region
    $region6: #{stack_decoder_forward.1} parent=1 // pred_check
      _
    $region7: #{stack_decoder_forward.1} parent=1 // pred_check_branch
      %22 = sbr.rel (0) target = $region9
    $region8: #{stack_decoder_forward.1} parent=1 // pred_region
      _
    $region9: #{stack_decoder_forward.1} parent=1 // pred_fallthru
      _
    // Predicated region
    $region10: #{stack_decoder_forward.1} parent=1 // pred_check
      _
    $region11: #{stack_decoder_forward.1} parent=1 // pred_check_branch
      %24 = sbr.rel (0) target = $region13
    $region12: #{stack_decoder_forward.1} parent=1 // pred_region
      _
    $region13: #{stack_decoder_forward.1} parent=1 // pred_fallthru
      _
    // Predicated region
    $region14: #{stack_decoder_forward.1} parent=1 // pred_check
      _
    $region15: #{stack_decoder_forward.1} parent=1 // pred_check_branch
      %26 = sbr.rel (0) target = $region17
    $region16: #{stack_decoder_forward.1} parent=1 // pred_region
      %28 = vsyncadd [#allocation5], 0
      %s29 = sshll.u32 %s3, 4
      %s30 = int_to_ptr.hbm [resolvable:$true] %s29
      %s31 = sshll.u32 [#allocation4], 4
      %s32 = int_to_ptr.vmem [resolvable:$true] %s31
      %37 = dma.hbm_to_vmem [thread:$0]  %s30, 1024, %s32, [#allocation5], 512, 512, 32
    $region17: #{stack_decoder_forward.1} parent=1 // pred_fallthru
      _
    // Predicated region
    $region18: #{stack_decoder_forward.1} parent=1 // pred_check
      _
    $region19: #{stack_decoder_forward.1} parent=1 // pred_check_branch
      %39 = sbr.rel (0) target = $region21
    $region20: #{stack_decoder_forward.1} parent=1 // pred_region
      _
    $region21: #{stack_decoder_forward.1} parent=1 // pred_fallthru
      _
    // Predicated region
    $region22: #{stack_decoder_forward.1} parent=1 // pred_check
      _
    $region23: #{stack_decoder_forward.1} parent=1 // pred_check_branch
      %41 = sbr.rel (0) target = $region25
    $region24: #{stack_decoder_forward.1} parent=1 // pred_region
      _
    $region25: #{stack_decoder_forward.1} parent=1 // pred_fallthru
      _
    // Predicated region
    $region26: #{stack_decoder_forward.1} parent=1 // pred_check
      _
    $region27: #{stack_decoder_forward.1} parent=1 // pred_check_branch
      %43 = sbr.rel (0) target = $region29
    $region28: #{stack_decoder_forward.1} parent=1 // pred_region
      _
    $region29: #{stack_decoder_forward.1} parent=1 // pred_fallthru
      _
    // Predicated region
    $region30: #{stack_decoder_forward.1} parent=1 // pred_check
      _
    $region31: #{stack_decoder_forward.1} parent=1 // pred_check_branch
      %45 = sbr.rel (0) target = $region33
    $region32: #{stack_decoder_forward.1} parent=1 // pred_region
      _
    $region33: #{stack_decoder_forward.1} parent=1 // pred_fallthru
      _
    // Predicated region
    $region34: #{stack_decoder_forward.1} parent=1 // pred_check
      _
    $region35: #{stack_decoder_forward.1} parent=1 // pred_check_branch
      %47 = sbr.rel (0) target = $region37
    $region36: #{stack_decoder_forward.1} parent=1 // pred_region
      _
    $region37: #{stack_decoder_forward.1} parent=1 // pred_fallthru
      _
    // Predicated region
    $region38: #{stack_decoder_forward.1} parent=1 // pred_check
      _
    $region39: #{stack_decoder_forward.1} parent=1 // pred_check_branch
      %49 = sbr.rel (0) target = $region41
    $region40: #{stack_decoder_forward.1} parent=1 // pred_region
      _
    $region41: #{stack_decoder_forward.1} parent=1 // pred_fallthru
      _
    // Predicated region
    $region42: #{stack_decoder_forward.1} parent=1 // pred_check
      _
    $region43: #{stack_decoder_forward.1} parent=1 // pred_check_branch
      %51 = sbr.rel (0) target = $region45
    $region44: #{stack_decoder_forward.1} parent=1 // pred_region
      _
    $region45: #{stack_decoder_forward.1} parent=1 // pred_fallthru
      _
    // Predicated region
    $region46: #{stack_decoder_forward.1} parent=1 // pred_check
      _
    $region47: #{stack_decoder_forward.1} parent=1 // pred_check_branch
      %53 = sbr.rel (0) target = $region49
    $region48: #{stack_decoder_forward.1} parent=1 // pred_region
      _
    $region49: #{stack_decoder_forward.1} parent=1 // pred_fallthru
      _
    // Predicated region
    $region50: #{stack_decoder_forward.1} parent=1 // pred_check
      _
    $region51: #{stack_decoder_forward.1} parent=1 // pred_check_branch
      %55 = sbr.rel (0) target = $region53
    $region52: #{stack_decoder_forward.1} parent=1 // pred_region
      _
    $region53: #{stack_decoder_forward.1} parent=1 // pred_fallthru
      _
    // Predicated region
    $region54: #{stack_decoder_forward.1} parent=1 // pred_check
      _
    $region55: #{stack_decoder_forward.1} parent=1 // pred_check_branch
      %57 = sbr.rel (0) target = $region57
    $region56: #{stack_decoder_forward.1} parent=1 // pred_region
      %59 = dma.done [#allocation5], 1024
    $region57: #{stack_decoder_forward.1} parent=1 // pred_fallthru
      _
    %v60 = vld [vmem:[%s0] sm:$0xff]
    %v61 = vld [vmem:[%s2] sm:$0xff]
    %v62 = vld [vmem:[%s2 + $0x8] sm:$0xff]
    %v63 = vld [vmem:[%s2 + $0x10] sm:$0xff]
    %v64 = vld [vmem:[%s2 + $0x18] sm:$0xff]
    %v65 = vld [vmem:[%s2 + $0x20] sm:$0xff]
    %v66 = vld [vmem:[%s2 + $0x28] sm:$0xff]
    %v67 = vld [vmem:[%s2 + $0x30] sm:$0xff]
    %v68 = vld [vmem:[%s2 + $0x38] sm:$0xff]
    %v69 = vld [vmem:[%s2 + $0x40] sm:$0xff]
    %v70 = vld [vmem:[%s2 + $0x48] sm:$0xff]
    %v71 = vld [vmem:[%s2 + $0x50] sm:$0xff]
    %v72 = vld [vmem:[%s2 + $0x58] sm:$0xff]
    %v73 = vld [vmem:[%s2 + $0x60] sm:$0xff]
    %v74 = vld [vmem:[%s2 + $0x68] sm:$0xff]
    %v75 = vld [vmem:[%s2 + $0x70] sm:$0xff]
    %v76 = vld [vmem:[%s2 + $0x78] sm:$0xff]
    %vm77 = vcmask 523264
    %v79 = vsel %vm77, %v60, 0
    %81 = vmatpush.msra.mxu0 0.0
    %82 = vmatpush.msra.mxu0 0.0
    %83 = vmatpush.msra.mxu0 0.0
    %84 = vmatpush.msra.mxu0 0.0
    %85 = vmatpush.msra.mxu0 0.0
    %86 = vmatpush.msra.mxu0 0.0
    %87 = vmatpush.msra.mxu0 0.0
    %88 = vmatpush.msra.mxu0 0.0
    %89 = vmatpush.msra.mxu0 %v75
    %90 = vmatpush.msra.mxu0 %v73
    %91 = vmatpush.msra.mxu0 %v71
    %92 = vmatpush.msra.mxu0 %v69
    %93 = vmatpush.msra.mxu0 %v67
    %94 = vmatpush.msra.mxu0 %v65
    %95 = vmatpush.msra.mxu0 %v63
    %96 = vmatpush.msra.mxu0 %v61
    %97 = vmatmul.f32.gmra.mxu0 %v79
    %v98 = vpop.f32.mrf.mxu0
    %v99 = vadd.f32 0.0, %v98
    %100 = vdwg.mxu0
    %101 = vmatpush.msra.mxu0 0.0
    %102 = vmatpush.msra.mxu0 0.0
    %103 = vmatpush.msra.mxu0 0.0
    %104 = vmatpush.msra.mxu0 0.0
    %105 = vmatpush.msra.mxu0 0.0
    %106 = vmatpush.msra.mxu0 0.0
    %107 = vmatpush.msra.mxu0 0.0
    %108 = vmatpush.msra.mxu0 0.0
    %109 = vmatpush.msra.mxu0 %v76
    %110 = vmatpush.msra.mxu0 %v74
    %111 = vmatpush.msra.mxu0 %v72
    %112 = vmatpush.msra.mxu0 %v70
    %113 = vmatpush.msra.mxu0 %v68
    %114 = vmatpush.msra.mxu0 %v66
    %115 = vmatpush.msra.mxu0 %v64
    %116 = vmatpush.msra.mxu0 %v62
    %117 = vmatmul.f32.gmra.mxu0 %v79
    %v118 = vpop.f32.mrf.mxu0
    %v119 = vadd.f32 0.0, %v118
    %120 = vdwg.mxu0
    %121 = vst [vmem:[#allocation2] sm:$0xf] %v99
    %122 = vst [vmem:[#allocation2 + $0x8] sm:$0xf] %v119
    %v123 = vld [vmem:[%s1] sm:$0xff]
    %s125 = scalar_lea.vmem [#allocation1], 1
    %126 = vst [vmem:[%s125] ss:$2 sm:$0xff] %v123
    %v127 = vld.sshfl [vmem:[#allocation1] sm:$0xff pattern:$0x75316420]
    %v128 = vld.sshfl [vmem:[#allocation1 + $0x8] sm:$0xff pattern:$0x75316420]
    %131 = vst [vmem:[#allocation2] sm:$0xf0] %v127
    %132 = vst [vmem:[#allocation2 + $0x8] sm:$0xf0] %v128
    %v135 = vrot.slane %v99, 4
    %v136 = vrot.slane %v119, 4
    %139 = vst [vmem:[#allocation2 + $0x10] sm:$0xf] %v135
    %140 = vst [vmem:[#allocation2 + $0x18] sm:$0xf] %v136
    %s141 = scalar_lea.vmem %s1, 8
    %v142 = vld [vmem:[%s141] sm:$0xff]
    %s144 = scalar_lea.vmem [#allocation1], 1
    %145 = vst [vmem:[%s144] ss:$2 sm:$0xff] %v142
    %v146 = vld.sshfl [vmem:[#allocation1] sm:$0xff pattern:$0x75316420]
    %v147 = vld.sshfl [vmem:[#allocation1 + $0x8] sm:$0xff pattern:$0x75316420]
    %150 = vst [vmem:[#allocation2 + $0x10] sm:$0xf0] %v146
    %151 = vst [vmem:[#allocation2 + $0x18] sm:$0xf0] %v147
    %v152 = vld [vmem:[#allocation4] ss:$8 sm:$0xf]
    %s153 = scalar_lea.vmem [#allocation4], 1
    %v154 = vld [vmem:[%s153] ss:$8 sm:$0xf]
    %s155 = scalar_lea.vmem [#allocation4], 2
    %v156 = vld [vmem:[%s155] ss:$8 sm:$0xf]
    %s157 = scalar_lea.vmem [#allocation4], 3
    %v158 = vld [vmem:[%s157] ss:$8 sm:$0xf]
    %s159 = scalar_lea.vmem [#allocation4], 4
    %v160 = vld [vmem:[%s159] ss:$8 sm:$0xf]
    %s161 = scalar_lea.vmem [#allocation4], 5
    %v162 = vld [vmem:[%s161] ss:$8 sm:$0xf]
    %s163 = scalar_lea.vmem [#allocation4], 6
    %v164 = vld [vmem:[%s163] ss:$8 sm:$0xf]
    %s165 = scalar_lea.vmem [#allocation4], 7
    %v166 = vld [vmem:[%s165] ss:$8 sm:$0xf]
    %s167 = scalar_lea.vmem [#allocation4], 32
    %v168 = vld [vmem:[%s167] ss:$8 sm:$0xf]
    %v169 = vld [vmem:[#allocation2] sm:$0xff]
    %v170 = vld [vmem:[#allocation2 + $0x8] sm:$0xff]
    %v171 = vld [vmem:[#allocation2 + $0x10] sm:$0xff]
    %v172 = vld [vmem:[#allocation2 + $0x18] sm:$0xff]
    %173 = vrot.lane.b32.xlu0 %v169, 17
    %v174 = vpop.permute.xlu0 %173
    %175 = vrot.lane.b32.xlu0 %v170, 17
    %v176 = vpop.permute.xlu0 %175
    %177 = vrot.lane.b32.xlu0 %v171, 17
    %v178 = vpop.permute.xlu0 %177
    %179 = vrot.lane.b32.xlu0 %v172, 17
    %v180 = vpop.permute.xlu0 %179
    %v181 = vlaneseq
    %v182 = vand.u32 %v181, 127
    %vm183 = vcmp.lt.s32.totalorder %v182, 17
    %v184 = vsel %vm183, %v178, %v180
    %v185 = vsel %vm183, %v176, %v178
    %v186 = vsel %vm183, %v174, %v176
    %v187 = vsel %vm183, %v180, %v174
    %v189 = vperm.slane %v152, 0
    %v190 = vperm.slane %v152, 1
    %v191 = vperm.slane %v152, 2
    %v192 = vperm.slane %v152, 3
    %v197 = vmul.f32 %v187, %v189
    %v198 = vmul.f32 %v186, %v190
    %v199 = vmul.f32 %v185, %v191
    %v200 = vmul.f32 %v184, %v192
    %201 = vst [vmem:[#allocation3] sm:$0xff] %v197
    %202 = vst [vmem:[#allocation3 + $0x8] sm:$0xff] %v198
    %203 = vst [vmem:[#allocation3 + $0x10] sm:$0xff] %v199
    %204 = vst [vmem:[#allocation3 + $0x18] sm:$0xff] %v200
    %205 = vrot.lane.b32.xlu0 %v169, 16
    %v206 = vpop.permute.xlu0 %205
    %207 = vrot.lane.b32.xlu0 %v170, 16
    %v208 = vpop.permute.xlu0 %207
    %209 = vrot.lane.b32.xlu0 %v171, 16
    %v210 = vpop.permute.xlu0 %209
    %211 = vrot.lane.b32.xlu0 %v172, 16
    %v212 = vpop.permute.xlu0 %211
    %vm213 = vcmp.lt.s32.totalorder %v182, 16
    %v214 = vsel %vm213, %v210, %v212
    %v215 = vsel %vm213, %v208, %v210
    %v216 = vsel %vm213, %v206, %v208
    %v217 = vsel %vm213, %v212, %v206
    %v219 = vperm.slane %v154, 0
    %v220 = vperm.slane %v154, 1
    %v221 = vperm.slane %v154, 2
    %v222 = vperm.slane %v154, 3
    %v227 = vmul.f32 %v217, %v219
    %v228 = vmul.f32 %v216, %v220
    %v229 = vmul.f32 %v215, %v221
    %v230 = vmul.f32 %v214, %v222
    %231 = vst [vmem:[#allocation3 + $0x20] sm:$0xff] %v227
    %232 = vst [vmem:[#allocation3 + $0x28] sm:$0xff] %v228
    %233 = vst [vmem:[#allocation3 + $0x30] sm:$0xff] %v229
    %234 = vst [vmem:[#allocation3 + $0x38] sm:$0xff] %v230
    %235 = vrot.lane.b32.xlu0 %v169, 15
    %v236 = vpop.permute.xlu0 %235
    %237 = vrot.lane.b32.xlu0 %v170, 15
    %v238 = vpop.permute.xlu0 %237
    %239 = vrot.lane.b32.xlu0 %v171, 15
    %v240 = vpop.permute.xlu0 %239
    %241 = vrot.lane.b32.xlu0 %v172, 15
    %v242 = vpop.permute.xlu0 %241
    %vm243 = vcmp.lt.s32.totalorder %v182, 15
    %v244 = vsel %vm243, %v240, %v242
    %v245 = vsel %vm243, %v238, %v240
    %v246 = vsel %vm243, %v236, %v238
    %v247 = vsel %vm243, %v242, %v236
    %v249 = vperm.slane %v156, 0
    %v250 = vperm.slane %v156, 1
    %v251 = vperm.slane %v156, 2
    %v252 = vperm.slane %v156, 3
    %v257 = vmul.f32 %v247, %v249
    %v258 = vmul.f32 %v246, %v250
    %v259 = vmul.f32 %v245, %v251
    %v260 = vmul.f32 %v244, %v252
    %261 = vst [vmem:[#allocation3 + $0x40] sm:$0xff] %v257
    %262 = vst [vmem:[#allocation3 + $0x48] sm:$0xff] %v258
    %263 = vst [vmem:[#allocation3 + $0x50] sm:$0xff] %v259
    %264 = vst [vmem:[#allocation3 + $0x58] sm:$0xff] %v260
    %265 = vrot.lane.b32.xlu0 %v169, 1
    %v266 = vpop.permute.xlu0 %265
    %267 = vrot.lane.b32.xlu0 %v170, 1
    %v268 = vpop.permute.xlu0 %267
    %269 = vrot.lane.b32.xlu0 %v171, 1
    %v270 = vpop.permute.xlu0 %269
    %271 = vrot.lane.b32.xlu0 %v172, 1
    %v272 = vpop.permute.xlu0 %271
    %vm273 = vcmp.lt.s32.totalorder %v182, 1
    %v274 = vsel %vm273, %v270, %v272
    %v275 = vsel %vm273, %v268, %v270
    %v276 = vsel %vm273, %v266, %v268
    %v277 = vsel %vm273, %v272, %v266
    %v279 = vperm.slane %v158, 0
    %v280 = vperm.slane %v158, 1
    %v281 = vperm.slane %v158, 2
    %v282 = vperm.slane %v158, 3
    %v287 = vmul.f32 %v277, %v279
    %v288 = vmul.f32 %v276, %v280
    %v289 = vmul.f32 %v275, %v281
    %v290 = vmul.f32 %v274, %v282
    %291 = vst [vmem:[#allocation3 + $0x60] sm:$0xff] %v287
    %292 = vst [vmem:[#allocation3 + $0x68] sm:$0xff] %v288
    %293 = vst [vmem:[#allocation3 + $0x70] sm:$0xff] %v289
    %294 = vst [vmem:[#allocation3 + $0x78] sm:$0xff] %v290
    %v296 = vperm.slane %v160, 0
    %v297 = vperm.slane %v160, 1
    %v298 = vperm.slane %v160, 2
    %v299 = vperm.slane %v160, 3
    %v304 = vmul.f32 %v169, %v296
    %v305 = vmul.f32 %v170, %v297
    %v306 = vmul.f32 %v171, %v298
    %v307 = vmul.f32 %v172, %v299
    %308 = vst [vmem:[#allocation3 + $0x80] sm:$0xff] %v304
    %309 = vst [vmem:[#allocation3 + $0x88] sm:$0xff] %v305
    %310 = vst [vmem:[#allocation3 + $0x90] sm:$0xff] %v306
    %311 = vst [vmem:[#allocation3 + $0x98] sm:$0xff] %v307
    %312 = vrot.lane.b32.xlu0 %v169, 127
    %v313 = vpop.permute.xlu0 %312
    %314 = vrot.lane.b32.xlu0 %v170, 127
    %v315 = vpop.permute.xlu0 %314
    %316 = vrot.lane.b32.xlu0 %v171, 127
    %v317 = vpop.permute.xlu0 %316
    %318 = vrot.lane.b32.xlu0 %v172, 127
    %v319 = vpop.permute.xlu0 %318
    %vm320 = vcmp.lt.s32.totalorder %v182, 127
    %v321 = vsel %vm320, %v317, %v319
    %v322 = vsel %vm320, %v315, %v317
    %v323 = vsel %vm320, %v313, %v315
    %v324 = vsel %vm320, %v319, %v313
    %v326 = vperm.slane %v162, 0
    %v327 = vperm.slane %v162, 1
    %v328 = vperm.slane %v162, 2
    %v329 = vperm.slane %v162, 3
    %v334 = vmul.f32 %v323, %v326
    %v335 = vmul.f32 %v322, %v327
    %v336 = vmul.f32 %v321, %v328
    %v337 = vmul.f32 %v324, %v329
    %338 = vst [vmem:[#allocation3 + $0xa0] sm:$0xff] %v334
    %339 = vst [vmem:[#allocation3 + $0xa8] sm:$0xff] %v335
    %340 = vst [vmem:[#allocation3 + $0xb0] sm:$0xff] %v336
    %341 = vst [vmem:[#allocation3 + $0xb8] sm:$0xff] %v337
    %342 = vrot.lane.b32.xlu0 %v169, 113
    %v343 = vpop.permute.xlu0 %342
    %344 = vrot.lane.b32.xlu0 %v170, 113
    %v345 = vpop.permute.xlu0 %344
    %346 = vrot.lane.b32.xlu0 %v171, 113
    %v347 = vpop.permute.xlu0 %346
    %348 = vrot.lane.b32.xlu0 %v172, 113
    %v349 = vpop.permute.xlu0 %348
    %vm350 = vcmp.lt.s32.totalorder %v182, 113
    %v351 = vsel %vm350, %v347, %v349
    %v352 = vsel %vm350, %v345, %v347
    %v353 = vsel %vm350, %v343, %v345
    %v354 = vsel %vm350, %v349, %v343
    %v356 = vperm.slane %v164, 0
    %v357 = vperm.slane %v164, 1
    %v358 = vperm.slane %v164, 2
    %v359 = vperm.slane %v164, 3
    %v364 = vmul.f32 %v353, %v356
    %v365 = vmul.f32 %v352, %v357
    %v366 = vmul.f32 %v351, %v358
    %v367 = vmul.f32 %v354, %v359
    %368 = vst [vmem:[#allocation3 + $0xc0] sm:$0xff] %v364
    %369 = vst [vmem:[#allocation3 + $0xc8] sm:$0xff] %v365
    %370 = vst [vmem:[#allocation3 + $0xd0] sm:$0xff] %v366
    %371 = vst [vmem:[#allocation3 + $0xd8] sm:$0xff] %v367
    %372 = vrot.lane.b32.xlu0 %v169, 112
    %v373 = vpop.permute.xlu0 %372
    %374 = vrot.lane.b32.xlu0 %v170, 112
    %v375 = vpop.permute.xlu0 %374
    %376 = vrot.lane.b32.xlu0 %v171, 112
    %v377 = vpop.permute.xlu0 %376
    %378 = vrot.lane.b32.xlu0 %v172, 112
    %v379 = vpop.permute.xlu0 %378
    %vm380 = vcmp.lt.s32.totalorder %v182, 112
    %v381 = vsel %vm380, %v377, %v379
    %v382 = vsel %vm380, %v375, %v377
    %v383 = vsel %vm380, %v373, %v375
    %v384 = vsel %vm380, %v379, %v373
    %v386 = vperm.slane %v166, 0
    %v387 = vperm.slane %v166, 1
    %v388 = vperm.slane %v166, 2
    %v389 = vperm.slane %v166, 3
    %v394 = vmul.f32 %v383, %v386
    %v395 = vmul.f32 %v382, %v387
    %v396 = vmul.f32 %v381, %v388
    %v397 = vmul.f32 %v384, %v389
    %398 = vst [vmem:[#allocation3 + $0xe0] sm:$0xff] %v394
    %399 = vst [vmem:[#allocation3 + $0xe8] sm:$0xff] %v395
    %400 = vst [vmem:[#allocation3 + $0xf0] sm:$0xff] %v396
    %401 = vst [vmem:[#allocation3 + $0xf8] sm:$0xff] %v397
    %402 = vrot.lane.b32.xlu0 %v169, 111
    %v403 = vpop.permute.xlu0 %402
    %404 = vrot.lane.b32.xlu0 %v170, 111
    %v405 = vpop.permute.xlu0 %404
    %406 = vrot.lane.b32.xlu0 %v171, 111
    %v407 = vpop.permute.xlu0 %406
    %408 = vrot.lane.b32.xlu0 %v172, 111
    %v409 = vpop.permute.xlu0 %408
    %vm410 = vcmp.lt.s32.totalorder %v182, 111
    %v411 = vsel %vm410, %v407, %v409
    %v412 = vsel %vm410, %v405, %v407
    %v413 = vsel %vm410, %v403, %v405
    %v414 = vsel %vm410, %v409, %v403
    %v416 = vperm.slane %v168, 0
    %v417 = vperm.slane %v168, 1
    %v418 = vperm.slane %v168, 2
    %v419 = vperm.slane %v168, 3
    %v424 = vmul.f32 %v413, %v416
    %v425 = vmul.f32 %v412, %v417
    %v426 = vmul.f32 %v411, %v418
    %v427 = vmul.f32 %v414, %v419
    %428 = vst [vmem:[#allocation3 + $0x100] sm:$0xff] %v424
    %429 = vst [vmem:[#allocation3 + $0x108] sm:$0xff] %v425
    %430 = vst [vmem:[#allocation3 + $0x110] sm:$0xff] %v426
    %431 = vst [vmem:[#allocation3 + $0x118] sm:$0xff] %v427
    %v432 = vld [vmem:[%s4] sm:$0xff]
    %v433 = vld [vmem:[#allocation3] sm:$0xff]
    %v434 = vld [vmem:[#allocation3 + $0x8] sm:$0xff]
    %v435 = vld [vmem:[#allocation3 + $0x10] sm:$0xff]
    %v436 = vld [vmem:[#allocation3 + $0x18] sm:$0xff]
    %v437 = vld [vmem:[#allocation3 + $0x20] sm:$0xff]
    %v438 = vld [vmem:[#allocation3 + $0x28] sm:$0xff]
    %v439 = vld [vmem:[#allocation3 + $0x30] sm:$0xff]
    %v440 = vld [vmem:[#allocation3 + $0x38] sm:$0xff]
    %v441 = vld [vmem:[#allocation3 + $0x40] sm:$0xff]
    %v442 = vld [vmem:[#allocation3 + $0x48] sm:$0xff]
    %v443 = vld [vmem:[#allocation3 + $0x50] sm:$0xff]
    %v444 = vld [vmem:[#allocation3 + $0x58] sm:$0xff]
    %v445 = vld [vmem:[#allocation3 + $0x60] sm:$0xff]
    %v446 = vld [vmem:[#allocation3 + $0x68] sm:$0xff]
    %v447 = vld [vmem:[#allocation3 + $0x70] sm:$0xff]
    %v448 = vld [vmem:[#allocation3 + $0x78] sm:$0xff]
    %v449 = vld [vmem:[#allocation3 + $0x80] sm:$0xff]
    %v450 = vld [vmem:[#allocation3 + $0x88] sm:$0xff]
    %v451 = vld [vmem:[#allocation3 + $0x90] sm:$0xff]
    %v452 = vld [vmem:[#allocation3 + $0x98] sm:$0xff]
    %v453 = vld [vmem:[#allocation3 + $0xa0] sm:$0xff]
    %v454 = vld [vmem:[#allocation3 + $0xa8] sm:$0xff]
    %v455 = vld [vmem:[#allocation3 + $0xb0] sm:$0xff]
    %v456 = vld [vmem:[#allocation3 + $0xb8] sm:$0xff]
    %v457 = vld [vmem:[#allocation3 + $0xc0] sm:$0xff]
    %v458 = vld [vmem:[#allocation3 + $0xc8] sm:$0xff]
    %v459 = vld [vmem:[#allocation3 + $0xd0] sm:$0xff]
    %v460 = vld [vmem:[#allocation3 + $0xd8] sm:$0xff]
    %v461 = vld [vmem:[#allocation3 + $0xe0] sm:$0xff]
    %v462 = vld [vmem:[#allocation3 + $0xe8] sm:$0xff]
    %v463 = vld [vmem:[#allocation3 + $0xf0] sm:$0xff]
    %v464 = vld [vmem:[#allocation3 + $0xf8] sm:$0xff]
    %v465 = vld [vmem:[#allocation3 + $0x100] sm:$0xff]
    %v466 = vld [vmem:[#allocation3 + $0x108] sm:$0xff]
    %v467 = vld [vmem:[#allocation3 + $0x110] sm:$0xff]
    %v468 = vld [vmem:[#allocation3 + $0x118] sm:$0xff]
    %vm469 = vcmask 588800
    %v471 = vsel %vm469, %v432, 0
    %473 = vmatpush.msra.mxu0 0.0
    %474 = vmatpush.msra.mxu0 0.0
    %475 = vmatpush.msra.mxu0 0.0
    %476 = vmatpush.msra.mxu0 0.0
    %477 = vmatpush.msra.mxu0 0.0
    %478 = vmatpush.msra.mxu0 0.0
    %479 = vmatpush.msra.mxu0 0.0
    %480 = vmatpush.msra.mxu0 %v465
    %481 = vmatpush.msra.mxu0 %v461
    %482 = vmatpush.msra.mxu0 %v457
    %483 = vmatpush.msra.mxu0 %v453
    %484 = vmatpush.msra.mxu0 %v449
    %485 = vmatpush.msra.mxu0 %v445
    %486 = vmatpush.msra.mxu0 %v441
    %487 = vmatpush.msra.mxu0 %v437
    %488 = vmatpush.msra.mxu0 %v433
    %489 = vmatmul.f32.gmra.mxu0 %v471
    %v490 = vpop.f32.mrf.mxu0
    %v491 = vadd.f32 0.0, %v490
    %492 = vdwg.mxu0
    %493 = vmatpush.msra.mxu0 0.0
    %494 = vmatpush.msra.mxu0 0.0
    %495 = vmatpush.msra.mxu0 0.0
    %496 = vmatpush.msra.mxu0 0.0
    %497 = vmatpush.msra.mxu0 0.0
    %498 = vmatpush.msra.mxu0 0.0
    %499 = vmatpush.msra.mxu0 0.0
    %500 = vmatpush.msra.mxu0 %v466
    %501 = vmatpush.msra.mxu0 %v462
    %502 = vmatpush.msra.mxu0 %v458
    %503 = vmatpush.msra.mxu0 %v454
    %504 = vmatpush.msra.mxu0 %v450
    %505 = vmatpush.msra.mxu0 %v446
    %506 = vmatpush.msra.mxu0 %v442
    %507 = vmatpush.msra.mxu0 %v438
    %508 = vmatpush.msra.mxu0 %v434
    %509 = vmatmul.f32.gmra.mxu0 %v471
    %v510 = vpop.f32.mrf.mxu0
    %v511 = vadd.f32 0.0, %v510
    %512 = vdwg.mxu0
    %513 = vmatpush.msra.mxu0 0.0
    %514 = vmatpush.msra.mxu0 0.0
    %515 = vmatpush.msra.mxu0 0.0
    %516 = vmatpush.msra.mxu0 0.0
    %517 = vmatpush.msra.mxu0 0.0
    %518 = vmatpush.msra.mxu0 0.0
    %519 = vmatpush.msra.mxu0 0.0
    %520 = vmatpush.msra.mxu0 %v467
    %521 = vmatpush.msra.mxu0 %v463
    %522 = vmatpush.msra.mxu0 %v459
    %523 = vmatpush.msra.mxu0 %v455
    %524 = vmatpush.msra.mxu0 %v451
    %525 = vmatpush.msra.mxu0 %v447
    %526 = vmatpush.msra.mxu0 %v443
    %527 = vmatpush.msra.mxu0 %v439
    %528 = vmatpush.msra.mxu0 %v435
    %529 = vmatmul.f32.gmra.mxu0 %v471
    %v530 = vpop.f32.mrf.mxu0
    %v531 = vadd.f32 0.0, %v530
    %532 = vdwg.mxu0
    %533 = vmatpush.msra.mxu0 0.0
    %534 = vmatpush.msra.mxu0 0.0
    %535 = vmatpush.msra.mxu0 0.0
    %536 = vmatpush.msra.mxu0 0.0
    %537 = vmatpush.msra.mxu0 0.0
    %538 = vmatpush.msra.mxu0 0.0
    %539 = vmatpush.msra.mxu0 0.0
    %540 = vmatpush.msra.mxu0 %v468
    %541 = vmatpush.msra.mxu0 %v464
    %542 = vmatpush.msra.mxu0 %v460
    %543 = vmatpush.msra.mxu0 %v456
    %544 = vmatpush.msra.mxu0 %v452
    %545 = vmatpush.msra.mxu0 %v448
    %546 = vmatpush.msra.mxu0 %v444
    %547 = vmatpush.msra.mxu0 %v440
    %548 = vmatpush.msra.mxu0 %v436
    %549 = vmatmul.f32.gmra.mxu0 %v471
    %v550 = vpop.f32.mrf.mxu0
    %v551 = vadd.f32 0.0, %v550
    %552 = vdwg.mxu0
    %v553 = vadd.f32 %v491, %v511
    %v554 = vadd.f32 %v553, %v531
    %v555 = vadd.f32 %v554, %v551
    %556 = vadd.xlane.f32.xlu0 %v555
    %v557 = vpop.xlane.xlu0 %556
    %v558 = vmul.f32 %v557, 0.001953125
    %v559 = vsub.f32 %v491, %v558
    %v560 = vsub.f32 %v511, %v558
    %v561 = vsub.f32 %v531, %v558
    %v562 = vsub.f32 %v551, %v558
    %v563 = vmul.f32 %v559, %v559
    %v564 = vmul.f32 %v560, %v560
    %v565 = vmul.f32 %v561, %v561
    %v566 = vmul.f32 %v562, %v562
    %v567 = vadd.f32 %v563, %v564
    %v568 = vadd.f32 %v567, %v565
    %v569 = vadd.f32 %v568, %v566
    %570 = vadd.xlane.f32.xlu0 %v569
    %v571 = vpop.xlane.xlu0 %570
    %v572 = vmul.f32 %v571, 0.001953125
    %v573 = vadd.f32 %v572, 0.0001
    %v574 = vrsqrt.pop %v573
    %v575 = vmul.f32 %v574, %v573
    %v576 = vmul.f32 %v575, %v574
    %v577 = vmul.f32 0.5, %v576
    %v578 = vsub.f32 1.5, %v577
    %v579 = vmul.f32 %v574, %v578
    %vm580 = vweird.f32 %v573
    %vm581 = vweird.f32 %v574
    %vm582 = vmor %vm580, %vm581
    %v583 = vsel %vm582, %v574, %v579
    %v584 = vld [vmem:[%s5] sm:$0xff]
    %v585 = vmul.f32 %v583, %v584
    %587 = vset.pattern.permute.xlu0 0
    %588 = vperm.xlu0 %587, %v585
    %v589 = vpop.permute.xlu0 %588
    %v591 = vmul.f32 %v559, %v589
    %v592 = vmul.f32 %v560, %v589
    %v593 = vmul.f32 %v561, %v589
    %v594 = vmul.f32 %v562, %v589
    %v595 = vld [vmem:[%s6] sm:$0xff]
    %597 = vset.pattern.permute.xlu0 0
    %598 = vperm.xlu0 %597, %v595
    %v599 = vpop.permute.xlu0 %598
    %v601 = vadd.f32 %v591, %v599
    %v602 = vadd.f32 %v592, %v599
    %v603 = vadd.f32 %v593, %v599
    %v604 = vadd.f32 %v594, %v599
    %v605 = vmax.f32 %v601, 0.0
    %v606 = vmax.f32 %v602, 0.0
    %v607 = vmax.f32 %v603, 0.0
    %v608 = vmax.f32 %v604, 0.0
    %609 = vrot.lane.b32.xlu0 %v605, 17
    %v610 = vpop.permute.xlu0 %609
    %611 = vrot.lane.b32.xlu0 %v606, 17
    %v612 = vpop.permute.xlu0 %611
    %613 = vrot.lane.b32.xlu0 %v607, 17
    %v614 = vpop.permute.xlu0 %613
    %615 = vrot.lane.b32.xlu0 %v608, 17
    %v616 = vpop.permute.xlu0 %615
    %v617 = vsel %vm183, %v614, %v616
    %v618 = vsel %vm183, %v612, %v614
    %v619 = vsel %vm183, %v610, %v612
    %v620 = vsel %vm183, %v616, %v610
    %v621 = vmul.f32 %v620, %v189
    %v622 = vmul.f32 %v619, %v190
    %v623 = vmul.f32 %v618, %v191
    %v624 = vmul.f32 %v617, %v192
    %625 = vst [vmem:[#allocation3] sm:$0xff] %v621
    %626 = vst [vmem:[#allocation3 + $0x8] sm:$0xff] %v622
    %627 = vst [vmem:[#allocation3 + $0x10] sm:$0xff] %v623
    %628 = vst [vmem:[#allocation3 + $0x18] sm:$0xff] %v624
    %629 = vrot.lane.b32.xlu0 %v605, 16
    %v630 = vpop.permute.xlu0 %629
    %631 = vrot.lane.b32.xlu0 %v606, 16
    %v632 = vpop.permute.xlu0 %631
    %633 = vrot.lane.b32.xlu0 %v607, 16
    %v634 = vpop.permute.xlu0 %633
    %635 = vrot.lane.b32.xlu0 %v608, 16
    %v636 = vpop.permute.xlu0 %635
    %v637 = vsel %vm213, %v634, %v636
    %v638 = vsel %vm213, %v632, %v634
    %v639 = vsel %vm213, %v630, %v632
    %v640 = vsel %vm213, %v636, %v630
    %v641 = vmul.f32 %v640, %v219
    %v642 = vmul.f32 %v639, %v220
    %v643 = vmul.f32 %v638, %v221
    %v644 = vmul.f32 %v637, %v222
    %645 = vst [vmem:[#allocation3 + $0x20] sm:$0xff] %v641
    %646 = vst [vmem:[#allocation3 + $0x28] sm:$0xff] %v642
    %647 = vst [vmem:[#allocation3 + $0x30] sm:$0xff] %v643
    %648 = vst [vmem:[#allocation3 + $0x38] sm:$0xff] %v644
    %649 = vrot.lane.b32.xlu0 %v605, 15
    %v650 = vpop.permute.xlu0 %649
    %651 = vrot.lane.b32.xlu0 %v606, 15
    %v652 = vpop.permute.xlu0 %651
    %653 = vrot.lane.b32.xlu0 %v607, 15
    %v654 = vpop.permute.xlu0 %653
    %655 = vrot.lane.b32.xlu0 %v608, 15
    %v656 = vpop.permute.xlu0 %655
    %v657 = vsel %vm243, %v654, %v656
    %v658 = vsel %vm243, %v652, %v654
    %v659 = vsel %vm243, %v650, %v652
    %v660 = vsel %vm243, %v656, %v650
    %v661 = vmul.f32 %v660, %v249
    %v662 = vmul.f32 %v659, %v250
    %v663 = vmul.f32 %v658, %v251
    %v664 = vmul.f32 %v657, %v252
    %665 = vst [vmem:[#allocation3 + $0x40] sm:$0xff] %v661
    %666 = vst [vmem:[#allocation3 + $0x48] sm:$0xff] %v662
    %667 = vst [vmem:[#allocation3 + $0x50] sm:$0xff] %v663
    %668 = vst [vmem:[#allocation3 + $0x58] sm:$0xff] %v664
    %669 = vrot.lane.b32.xlu0 %v605, 1
    %v670 = vpop.permute.xlu0 %669
    %671 = vrot.lane.b32.xlu0 %v606, 1
    %v672 = vpop.permute.xlu0 %671
    %673 = vrot.lane.b32.xlu0 %v607, 1
    %v674 = vpop.permute.xlu0 %673
    %675 = vrot.lane.b32.xlu0 %v608, 1
    %v676 = vpop.permute.xlu0 %675
    %v677 = vsel %vm273, %v674, %v676
    %v678 = vsel %vm273, %v672, %v674
    %v679 = vsel %vm273, %v670, %v672
    %v680 = vsel %vm273, %v676, %v670
    %v681 = vmul.f32 %v680, %v279
    %v682 = vmul.f32 %v679, %v280
    %v683 = vmul.f32 %v678, %v281
    %v684 = vmul.f32 %v677, %v282
    %685 = vst [vmem:[#allocation3 + $0x60] sm:$0xff] %v681
    %686 = vst [vmem:[#allocation3 + $0x68] sm:$0xff] %v682
    %687 = vst [vmem:[#allocation3 + $0x70] sm:$0xff] %v683
    %688 = vst [vmem:[#allocation3 + $0x78] sm:$0xff] %v684
    %v689 = vmul.f32 %v605, %v296
    %v690 = vmul.f32 %v606, %v297
    %v691 = vmul.f32 %v607, %v298
    %v692 = vmul.f32 %v608, %v299
    %693 = vst [vmem:[#allocation3 + $0x80] sm:$0xff] %v689
    %694 = vst [vmem:[#allocation3 + $0x88] sm:$0xff] %v690
    %695 = vst [vmem:[#allocation3 + $0x90] sm:$0xff] %v691
    %696 = vst [vmem:[#allocation3 + $0x98] sm:$0xff] %v692
    %697 = vrot.lane.b32.xlu0 %v605, 127
    %v698 = vpop.permute.xlu0 %697
    %699 = vrot.lane.b32.xlu0 %v606, 127
    %v700 = vpop.permute.xlu0 %699
    %701 = vrot.lane.b32.xlu0 %v607, 127
    %v702 = vpop.permute.xlu0 %701
    %703 = vrot.lane.b32.xlu0 %v608, 127
    %v704 = vpop.permute.xlu0 %703
    %v705 = vsel %vm320, %v702, %v704
    %v706 = vsel %vm320, %v700, %v702
    %v707 = vsel %vm320, %v698, %v700
    %v708 = vsel %vm320, %v704, %v698
    %v709 = vmul.f32 %v707, %v326
    %v710 = vmul.f32 %v706, %v327
    %v711 = vmul.f32 %v705, %v328
    %v712 = vmul.f32 %v708, %v329
    %713 = vst [vmem:[#allocation3 + $0xa0] sm:$0xff] %v709
    %714 = vst [vmem:[#allocation3 + $0xa8] sm:$0xff] %v710
    %715 = vst [vmem:[#allocation3 + $0xb0] sm:$0xff] %v711
    %716 = vst [vmem:[#allocation3 + $0xb8] sm:$0xff] %v712
    %717 = vrot.lane.b32.xlu0 %v605, 113
    %v718 = vpop.permute.xlu0 %717
    %719 = vrot.lane.b32.xlu0 %v606, 113
    %v720 = vpop.permute.xlu0 %719
    %721 = vrot.lane.b32.xlu0 %v607, 113
    %v722 = vpop.permute.xlu0 %721
    %723 = vrot.lane.b32.xlu0 %v608, 113
    %v724 = vpop.permute.xlu0 %723
    %v725 = vsel %vm350, %v722, %v724
    %v726 = vsel %vm350, %v720, %v722
    %v727 = vsel %vm350, %v718, %v720
    %v728 = vsel %vm350, %v724, %v718
    %v729 = vmul.f32 %v727, %v356
    %v730 = vmul.f32 %v726, %v357
    %v731 = vmul.f32 %v725, %v358
    %v732 = vmul.f32 %v728, %v359
    %733 = vst [vmem:[#allocation3 + $0xc0] sm:$0xff] %v729
    %734 = vst [vmem:[#allocation3 + $0xc8] sm:$0xff] %v730
    %735 = vst [vmem:[#allocation3 + $0xd0] sm:$0xff] %v731
    %736 = vst [vmem:[#allocation3 + $0xd8] sm:$0xff] %v732
    %737 = vrot.lane.b32.xlu0 %v605, 112
    %v738 = vpop.permute.xlu0 %737
    %739 = vrot.lane.b32.xlu0 %v606, 112
    %v740 = vpop.permute.xlu0 %739
    %741 = vrot.lane.b32.xlu0 %v607, 112
    %v742 = vpop.permute.xlu0 %741
    %743 = vrot.lane.b32.xlu0 %v608, 112
    %v744 = vpop.permute.xlu0 %743
    %v745 = vsel %vm380, %v742, %v744
    %v746 = vsel %vm380, %v740, %v742
    %v747 = vsel %vm380, %v738, %v740
    %v748 = vsel %vm380, %v744, %v738
    %v749 = vmul.f32 %v747, %v386
    %v750 = vmul.f32 %v746, %v387
    %v751 = vmul.f32 %v745, %v388
    %v752 = vmul.f32 %v748, %v389
    %753 = vst [vmem:[#allocation3 + $0xe0] sm:$0xff] %v749
    %754 = vst [vmem:[#allocation3 + $0xe8] sm:$0xff] %v750
    %755 = vst [vmem:[#allocation3 + $0xf0] sm:$0xff] %v751
    %756 = vst [vmem:[#allocation3 + $0xf8] sm:$0xff] %v752
    %757 = vrot.lane.b32.xlu0 %v605, 111
    %v758 = vpop.permute.xlu0 %757
    %759 = vrot.lane.b32.xlu0 %v606, 111
    %v760 = vpop.permute.xlu0 %759
    %761 = vrot.lane.b32.xlu0 %v607, 111
    %v762 = vpop.permute.xlu0 %761
    %763 = vrot.lane.b32.xlu0 %v608, 111
    %v764 = vpop.permute.xlu0 %763
    %v765 = vsel %vm410, %v762, %v764
    %v766 = vsel %vm410, %v760, %v762
    %v767 = vsel %vm410, %v758, %v760
    %v768 = vsel %vm410, %v764, %v758
    %v769 = vmul.f32 %v767, %v416
    %v770 = vmul.f32 %v766, %v417
    %v771 = vmul.f32 %v765, %v418
    %v772 = vmul.f32 %v768, %v419
    %773 = vst [vmem:[#allocation3 + $0x100] sm:$0xff] %v769
    %774 = vst [vmem:[#allocation3 + $0x108] sm:$0xff] %v770
    %775 = vst [vmem:[#allocation3 + $0x110] sm:$0xff] %v771
    %776 = vst [vmem:[#allocation3 + $0x118] sm:$0xff] %v772
    %v777 = vld [vmem:[%s7] sm:$0xff]
    %v778 = vld [vmem:[#allocation3] sm:$0xff]
    %v779 = vld [vmem:[#allocation3 + $0x8] sm:$0xff]
    %v780 = vld [vmem:[#allocation3 + $0x10] sm:$0xff]
    %v781 = vld [vmem:[#allocation3 + $0x18] sm:$0xff]
    %v782 = vld [vmem:[#allocation3 + $0x20] sm:$0xff]
    %v783 = vld [vmem:[#allocation3 + $0x28] sm:$0xff]
    %v784 = vld [vmem:[#allocation3 + $0x30] sm:$0xff]
    %v785 = vld [vmem:[#allocation3 + $0x38] sm:$0xff]
    %v786 = vld [vmem:[#allocation3 + $0x40] sm:$0xff]
    %v787 = vld [vmem:[#allocation3 + $0x48] sm:$0xff]
    %v788 = vld [vmem:[#allocation3 + $0x50] sm:$0xff]
    %v789 = vld [vmem:[#allocation3 + $0x58] sm:$0xff]
    %v790 = vld [vmem:[#allocation3 + $0x60] sm:$0xff]
    %v791 = vld [vmem:[#allocation3 + $0x68] sm:$0xff]
    %v792 = vld [vmem:[#allocation3 + $0x70] sm:$0xff]
    %v793 = vld [vmem:[#allocation3 + $0x78] sm:$0xff]
    %v794 = vld [vmem:[#allocation3 + $0x80] sm:$0xff]
    %v795 = vld [vmem:[#allocation3 + $0x88] sm:$0xff]
    %v796 = vld [vmem:[#allocation3 + $0x90] sm:$0xff]
    %v797 = vld [vmem:[#allocation3 + $0x98] sm:$0xff]
    %v798 = vld [vmem:[#allocation3 + $0xa0] sm:$0xff]
    %v799 = vld [vmem:[#allocation3 + $0xa8] sm:$0xff]
    %v800 = vld [vmem:[#allocation3 + $0xb0] sm:$0xff]
    %v801 = vld [vmem:[#allocation3 + $0xb8] sm:$0xff]
    %v802 = vld [vmem:[#allocation3 + $0xc0] sm:$0xff]
    %v803 = vld [vmem:[#allocation3 + $0xc8] sm:$0xff]
    %v804 = vld [vmem:[#allocation3 + $0xd0] sm:$0xff]
    %v805 = vld [vmem:[#allocation3 + $0xd8] sm:$0xff]
    %v806 = vld [vmem:[#allocation3 + $0xe0] sm:$0xff]
    %v807 = vld [vmem:[#allocation3 + $0xe8] sm:$0xff]
    %v808 = vld [vmem:[#allocation3 + $0xf0] sm:$0xff]
    %v809 = vld [vmem:[#allocation3 + $0xf8] sm:$0xff]
    %v810 = vld [vmem:[#allocation3 + $0x100] sm:$0xff]
    %v811 = vld [vmem:[#allocation3 + $0x108] sm:$0xff]
    %v812 = vld [vmem:[#allocation3 + $0x110] sm:$0xff]
    %v813 = vld [vmem:[#allocation3 + $0x118] sm:$0xff]
    %v815 = vsel %vm469, %v777, 0
    %817 = vmatpush.msra.mxu0 0.0
    %818 = vmatpush.msra.mxu0 0.0
    %819 = vmatpush.msra.mxu0 0.0
    %820 = vmatpush.msra.mxu0 0.0
    %821 = vmatpush.msra.mxu0 0.0
    %822 = vmatpush.msra.mxu0 0.0
    %823 = vmatpush.msra.mxu0 0.0
    %824 = vmatpush.msra.mxu0 %v810
    %825 = vmatpush.msra.mxu0 %v806
    %826 = vmatpush.msra.mxu0 %v802
    %827 = vmatpush.msra.mxu0 %v798
    %828 = vmatpush.msra.mxu0 %v794
    %829 = vmatpush.msra.mxu0 %v790
    %830 = vmatpush.msra.mxu0 %v786
    %831 = vmatpush.msra.mxu0 %v782
    %832 = vmatpush.msra.mxu0 %v778
    %833 = vmatmul.f32.gmra.mxu0 %v815
    %v834 = vpop.f32.mrf.mxu0
    %v835 = vadd.f32 0.0, %v834
    %836 = vdwg.mxu0
    %837 = vmatpush.msra.mxu0 0.0
    %838 = vmatpush.msra.mxu0 0.0
    %839 = vmatpush.msra.mxu0 0.0
    %840 = vmatpush.msra.mxu0 0.0
    %841 = vmatpush.msra.mxu0 0.0
    %842 = vmatpush.msra.mxu0 0.0
    %843 = vmatpush.msra.mxu0 0.0
    %844 = vmatpush.msra.mxu0 %v811
    %845 = vmatpush.msra.mxu0 %v807
    %846 = vmatpush.msra.mxu0 %v803
    %847 = vmatpush.msra.mxu0 %v799
    %848 = vmatpush.msra.mxu0 %v795
    %849 = vmatpush.msra.mxu0 %v791
    %850 = vmatpush.msra.mxu0 %v787
    %851 = vmatpush.msra.mxu0 %v783
    %852 = vmatpush.msra.mxu0 %v779
    %853 = vmatmul.f32.gmra.mxu0 %v815
    %v854 = vpop.f32.mrf.mxu0
    %v855 = vadd.f32 0.0, %v854
    %856 = vdwg.mxu0
    %857 = vmatpush.msra.mxu0 0.0
    %858 = vmatpush.msra.mxu0 0.0
    %859 = vmatpush.msra.mxu0 0.0
    %860 = vmatpush.msra.mxu0 0.0
    %861 = vmatpush.msra.mxu0 0.0
    %862 = vmatpush.msra.mxu0 0.0
    %863 = vmatpush.msra.mxu0 0.0
    %864 = vmatpush.msra.mxu0 %v812
    %865 = vmatpush.msra.mxu0 %v808
    %866 = vmatpush.msra.mxu0 %v804
    %867 = vmatpush.msra.mxu0 %v800
    %868 = vmatpush.msra.mxu0 %v796
    %869 = vmatpush.msra.mxu0 %v792
    %870 = vmatpush.msra.mxu0 %v788
    %871 = vmatpush.msra.mxu0 %v784
    %872 = vmatpush.msra.mxu0 %v780
    %873 = vmatmul.f32.gmra.mxu0 %v815
    %v874 = vpop.f32.mrf.mxu0
    %v875 = vadd.f32 0.0, %v874
    %876 = vdwg.mxu0
    %877 = vmatpush.msra.mxu0 0.0
    %878 = vmatpush.msra.mxu0 0.0
    %879 = vmatpush.msra.mxu0 0.0
    %880 = vmatpush.msra.mxu0 0.0
    %881 = vmatpush.msra.mxu0 0.0
    %882 = vmatpush.msra.mxu0 0.0
    %883 = vmatpush.msra.mxu0 0.0
    %884 = vmatpush.msra.mxu0 %v813
    %885 = vmatpush.msra.mxu0 %v809
    %886 = vmatpush.msra.mxu0 %v805
    %887 = vmatpush.msra.mxu0 %v801
    %888 = vmatpush.msra.mxu0 %v797
    %889 = vmatpush.msra.mxu0 %v793
    %890 = vmatpush.msra.mxu0 %v789
    %891 = vmatpush.msra.mxu0 %v785
    %892 = vmatpush.msra.mxu0 %v781
    %893 = vmatmul.f32.gmra.mxu0 %v815
    %v894 = vpop.f32.mrf.mxu0
    %v895 = vadd.f32 0.0, %v894
    %896 = vdwg.mxu0
    %v897 = vadd.f32 %v835, %v855
    %v898 = vadd.f32 %v897, %v875
    %v899 = vadd.f32 %v898, %v895
    %900 = vadd.xlane.f32.xlu0 %v899
    %v901 = vpop.xlane.xlu0 %900
    %v902 = vmul.f32 %v901, 0.001953125
    %v903 = vsub.f32 %v835, %v902
    %v904 = vsub.f32 %v855, %v902
    %v905 = vsub.f32 %v875, %v902
    %v906 = vsub.f32 %v895, %v902
    %v907 = vmul.f32 %v903, %v903
    %v908 = vmul.f32 %v904, %v904
    %v909 = vmul.f32 %v905, %v905
    %v910 = vmul.f32 %v906, %v906
    %v911 = vadd.f32 %v907, %v908
    %v912 = vadd.f32 %v911, %v909
    %v913 = vadd.f32 %v912, %v910
    %914 = vadd.xlane.f32.xlu0 %v913
    %v915 = vpop.xlane.xlu0 %914
    %v916 = vmul.f32 %v915, 0.001953125
    %v917 = vadd.f32 %v916, 0.0001
    %v918 = vrsqrt.pop %v917
    %v919 = vmul.f32 %v918, %v917
    %v920 = vmul.f32 %v919, %v918
    %v921 = vmul.f32 0.5, %v920
    %v922 = vsub.f32 1.5, %v921
    %v923 = vmul.f32 %v918, %v922
    %vm924 = vweird.f32 %v917
    %vm925 = vweird.f32 %v918
    %vm926 = vmor %vm924, %vm925
    %v927 = vsel %vm926, %v918, %v923
    %v928 = vld [vmem:[%s8] sm:$0xff]
    %v929 = vmul.f32 %v927, %v928
    %931 = vset.pattern.permute.xlu0 0
    %932 = vperm.xlu0 %931, %v929
    %v933 = vpop.permute.xlu0 %932
    %v935 = vmul.f32 %v903, %v933
    %v936 = vmul.f32 %v904, %v933
    %v937 = vmul.f32 %v905, %v933
    %v938 = vmul.f32 %v906, %v933
    %v939 = vld [vmem:[%s9] sm:$0xff]
    %941 = vset.pattern.permute.xlu0 0
    %942 = vperm.xlu0 %941, %v939
    %v943 = vpop.permute.xlu0 %942
    %v945 = vadd.f32 %v935, %v943
    %v946 = vadd.f32 %v936, %v943
    %v947 = vadd.f32 %v937, %v943
    %v948 = vadd.f32 %v938, %v943
    %v949 = vmax.f32 %v945, 0.0
    %v950 = vmax.f32 %v946, 0.0
    %v951 = vmax.f32 %v947, 0.0
    %v952 = vmax.f32 %v948, 0.0
    %953 = vrot.lane.b32.xlu0 %v949, 17
    %v954 = vpop.permute.xlu0 %953
    %955 = vrot.lane.b32.xlu0 %v950, 17
    %v956 = vpop.permute.xlu0 %955
    %957 = vrot.lane.b32.xlu0 %v951, 17
    %v958 = vpop.permute.xlu0 %957
    %959 = vrot.lane.b32.xlu0 %v952, 17
    %v960 = vpop.permute.xlu0 %959
    %v961 = vsel %vm183, %v958, %v960
    %v962 = vsel %vm183, %v956, %v958
    %v963 = vsel %vm183, %v954, %v956
    %v964 = vsel %vm183, %v960, %v954
    %v965 = vmul.f32 %v964, %v189
    %v966 = vmul.f32 %v963, %v190
    %v967 = vmul.f32 %v962, %v191
    %v968 = vmul.f32 %v961, %v192
    %969 = vst [vmem:[#allocation3] sm:$0xff] %v965
    %970 = vst [vmem:[#allocation3 + $0x8] sm:$0xff] %v966
    %971 = vst [vmem:[#allocation3 + $0x10] sm:$0xff] %v967
    %972 = vst [vmem:[#allocation3 + $0x18] sm:$0xff] %v968
    %973 = vrot.lane.b32.xlu0 %v949, 16
    %v974 = vpop.permute.xlu0 %973
    %975 = vrot.lane.b32.xlu0 %v950, 16
    %v976 = vpop.permute.xlu0 %975
    %977 = vrot.lane.b32.xlu0 %v951, 16
    %v978 = vpop.permute.xlu0 %977
    %979 = vrot.lane.b32.xlu0 %v952, 16
    %v980 = vpop.permute.xlu0 %979
    %v981 = vsel %vm213, %v978, %v980
    %v982 = vsel %vm213, %v976, %v978
    %v983 = vsel %vm213, %v974, %v976
    %v984 = vsel %vm213, %v980, %v974
    %v985 = vmul.f32 %v984, %v219
    %v986 = vmul.f32 %v983, %v220
    %v987 = vmul.f32 %v982, %v221
    %v988 = vmul.f32 %v981, %v222
    %989 = vst [vmem:[#allocation3 + $0x20] sm:$0xff] %v985
    %990 = vst [vmem:[#allocation3 + $0x28] sm:$0xff] %v986
    %991 = vst [vmem:[#allocation3 + $0x30] sm:$0xff] %v987
    %992 = vst [vmem:[#allocation3 + $0x38] sm:$0xff] %v988
    %993 = vrot.lane.b32.xlu0 %v949, 15
    %v994 = vpop.permute.xlu0 %993
    %995 = vrot.lane.b32.xlu0 %v950, 15
    %v996 = vpop.permute.xlu0 %995
    %997 = vrot.lane.b32.xlu0 %v951, 15
    %v998 = vpop.permute.xlu0 %997
    %999 = vrot.lane.b32.xlu0 %v952, 15
    %v1000 = vpop.permute.xlu0 %999
    %v1001 = vsel %vm243, %v998, %v1000
    %v1002 = vsel %vm243, %v996, %v998
    %v1003 = vsel %vm243, %v994, %v996
    %v1004 = vsel %vm243, %v1000, %v994
    %v1005 = vmul.f32 %v1004, %v249
    %v1006 = vmul.f32 %v1003, %v250
    %v1007 = vmul.f32 %v1002, %v251
    %v1008 = vmul.f32 %v1001, %v252
    %1009 = vst [vmem:[#allocation3 + $0x40] sm:$0xff] %v1005
    %1010 = vst [vmem:[#allocation3 + $0x48] sm:$0xff] %v1006
    %1011 = vst [vmem:[#allocation3 + $0x50] sm:$0xff] %v1007
    %1012 = vst [vmem:[#allocation3 + $0x58] sm:$0xff] %v1008
    %1013 = vrot.lane.b32.xlu0 %v949, 1
    %v1014 = vpop.permute.xlu0 %1013
    %1015 = vrot.lane.b32.xlu0 %v950, 1
    %v1016 = vpop.permute.xlu0 %1015
    %1017 = vrot.lane.b32.xlu0 %v951, 1
    %v1018 = vpop.permute.xlu0 %1017
    %1019 = vrot.lane.b32.xlu0 %v952, 1
    %v1020 = vpop.permute.xlu0 %1019
    %v1021 = vsel %vm273, %v1018, %v1020
    %v1022 = vsel %vm273, %v1016, %v1018
    %v1023 = vsel %vm273, %v1014, %v1016
    %v1024 = vsel %vm273, %v1020, %v1014
    %v1025 = vmul.f32 %v1024, %v279
    %v1026 = vmul.f32 %v1023, %v280
    %v1027 = vmul.f32 %v1022, %v281
    %v1028 = vmul.f32 %v1021, %v282
    %1029 = vst [vmem:[#allocation3 + $0x60] sm:$0xff] %v1025
    %1030 = vst [vmem:[#allocation3 + $0x68] sm:$0xff] %v1026
    %1031 = vst [vmem:[#allocation3 + $0x70] sm:$0xff] %v1027
    %1032 = vst [vmem:[#allocation3 + $0x78] sm:$0xff] %v1028
    %v1033 = vmul.f32 %v949, %v296
    %v1034 = vmul.f32 %v950, %v297
    %v1035 = vmul.f32 %v951, %v298
    %v1036 = vmul.f32 %v952, %v299
    %1037 = vst [vmem:[#allocation3 + $0x80] sm:$0xff] %v1033
    %1038 = vst [vmem:[#allocation3 + $0x88] sm:$0xff] %v1034
    %1039 = vst [vmem:[#allocation3 + $0x90] sm:$0xff] %v1035
    %1040 = vst [vmem:[#allocation3 + $0x98] sm:$0xff] %v1036
    %1041 = vrot.lane.b32.xlu0 %v949, 127
    %v1042 = vpop.permute.xlu0 %1041
    %1043 = vrot.lane.b32.xlu0 %v950, 127
    %v1044 = vpop.permute.xlu0 %1043
    %1045 = vrot.lane.b32.xlu0 %v951, 127
    %v1046 = vpop.permute.xlu0 %1045
    %1047 = vrot.lane.b32.xlu0 %v952, 127
    %v1048 = vpop.permute.xlu0 %1047
    %v1049 = vsel %vm320, %v1046, %v1048
    %v1050 = vsel %vm320, %v1044, %v1046
    %v1051 = vsel %vm320, %v1042, %v1044
    %v1052 = vsel %vm320, %v1048, %v1042
    %v1053 = vmul.f32 %v1051, %v326
    %v1054 = vmul.f32 %v1050, %v327
    %v1055 = vmul.f32 %v1049, %v328
    %v1056 = vmul.f32 %v1052, %v329
    %1057 = vst [vmem:[#allocation3 + $0xa0] sm:$0xff] %v1053
    %1058 = vst [vmem:[#allocation3 + $0xa8] sm:$0xff] %v1054
    %1059 = vst [vmem:[#allocation3 + $0xb0] sm:$0xff] %v1055
    %1060 = vst [vmem:[#allocation3 + $0xb8] sm:$0xff] %v1056
    %1061 = vrot.lane.b32.xlu0 %v949, 113
    %v1062 = vpop.permute.xlu0 %1061
    %1063 = vrot.lane.b32.xlu0 %v950, 113
    %v1064 = vpop.permute.xlu0 %1063
    %1065 = vrot.lane.b32.xlu0 %v951, 113
    %v1066 = vpop.permute.xlu0 %1065
    %1067 = vrot.lane.b32.xlu0 %v952, 113
    %v1068 = vpop.permute.xlu0 %1067
    %v1069 = vsel %vm350, %v1066, %v1068
    %v1070 = vsel %vm350, %v1064, %v1066
    %v1071 = vsel %vm350, %v1062, %v1064
    %v1072 = vsel %vm350, %v1068, %v1062
    %v1073 = vmul.f32 %v1071, %v356
    %v1074 = vmul.f32 %v1070, %v357
    %v1075 = vmul.f32 %v1069, %v358
    %v1076 = vmul.f32 %v1072, %v359
    %1077 = vst [vmem:[#allocation3 + $0xc0] sm:$0xff] %v1073
    %1078 = vst [vmem:[#allocation3 + $0xc8] sm:$0xff] %v1074
    %1079 = vst [vmem:[#allocation3 + $0xd0] sm:$0xff] %v1075
    %1080 = vst [vmem:[#allocation3 + $0xd8] sm:$0xff] %v1076
    %1081 = vrot.lane.b32.xlu0 %v949, 112
    %v1082 = vpop.permute.xlu0 %1081
    %1083 = vrot.lane.b32.xlu0 %v950, 112
    %v1084 = vpop.permute.xlu0 %1083
    %1085 = vrot.lane.b32.xlu0 %v951, 112
    %v1086 = vpop.permute.xlu0 %1085
    %1087 = vrot.lane.b32.xlu0 %v952, 112
    %v1088 = vpop.permute.xlu0 %1087
    %v1089 = vsel %vm380, %v1086, %v1088
    %v1090 = vsel %vm380, %v1084, %v1086
    %v1091 = vsel %vm380, %v1082, %v1084
    %v1092 = vsel %vm380, %v1088, %v1082
    %v1093 = vmul.f32 %v1091, %v386
    %v1094 = vmul.f32 %v1090, %v387
    %v1095 = vmul.f32 %v1089, %v388
    %v1096 = vmul.f32 %v1092, %v389
    %1097 = vst [vmem:[#allocation3 + $0xe0] sm:$0xff] %v1093
    %1098 = vst [vmem:[#allocation3 + $0xe8] sm:$0xff] %v1094
    %1099 = vst [vmem:[#allocation3 + $0xf0] sm:$0xff] %v1095
    %1100 = vst [vmem:[#allocation3 + $0xf8] sm:$0xff] %v1096
    %1101 = vrot.lane.b32.xlu0 %v949, 111
    %v1102 = vpop.permute.xlu0 %1101
    %1103 = vrot.lane.b32.xlu0 %v950, 111
    %v1104 = vpop.permute.xlu0 %1103
    %1105 = vrot.lane.b32.xlu0 %v951, 111
    %v1106 = vpop.permute.xlu0 %1105
    %1107 = vrot.lane.b32.xlu0 %v952, 111
    %v1108 = vpop.permute.xlu0 %1107
    %v1109 = vsel %vm410, %v1106, %v1108
    %v1110 = vsel %vm410, %v1104, %v1106
    %v1111 = vsel %vm410, %v1102, %v1104
    %v1112 = vsel %vm410, %v1108, %v1102
    %v1113 = vmul.f32 %v1111, %v416
    %v1114 = vmul.f32 %v1110, %v417
    %v1115 = vmul.f32 %v1109, %v418
    %v1116 = vmul.f32 %v1112, %v419
    %1117 = vst [vmem:[#allocation3 + $0x100] sm:$0xff] %v1113
    %1118 = vst [vmem:[#allocation3 + $0x108] sm:$0xff] %v1114
    %1119 = vst [vmem:[#allocation3 + $0x110] sm:$0xff] %v1115
    %1120 = vst [vmem:[#allocation3 + $0x118] sm:$0xff] %v1116
    %v1121 = vld [vmem:[%s10] sm:$0xff]
    %v1122 = vld [vmem:[#allocation3] sm:$0xff]
    %v1123 = vld [vmem:[#allocation3 + $0x8] sm:$0xff]
    %v1124 = vld [vmem:[#allocation3 + $0x10] sm:$0xff]
    %v1125 = vld [vmem:[#allocation3 + $0x18] sm:$0xff]
    %v1126 = vld [vmem:[#allocation3 + $0x20] sm:$0xff]
    %v1127 = vld [vmem:[#allocation3 + $0x28] sm:$0xff]
    %v1128 = vld [vmem:[#allocation3 + $0x30] sm:$0xff]
    %v1129 = vld [vmem:[#allocation3 + $0x38] sm:$0xff]
    %v1130 = vld [vmem:[#allocation3 + $0x40] sm:$0xff]
    %v1131 = vld [vmem:[#allocation3 + $0x48] sm:$0xff]
    %v1132 = vld [vmem:[#allocation3 + $0x50] sm:$0xff]
    %v1133 = vld [vmem:[#allocation3 + $0x58] sm:$0xff]
    %v1134 = vld [vmem:[#allocation3 + $0x60] sm:$0xff]
    %v1135 = vld [vmem:[#allocation3 + $0x68] sm:$0xff]
    %v1136 = vld [vmem:[#allocation3 + $0x70] sm:$0xff]
    %v1137 = vld [vmem:[#allocation3 + $0x78] sm:$0xff]
    %v1138 = vld [vmem:[#allocation3 + $0x80] sm:$0xff]
    %v1139 = vld [vmem:[#allocation3 + $0x88] sm:$0xff]
    %v1140 = vld [vmem:[#allocation3 + $0x90] sm:$0xff]
    %v1141 = vld [vmem:[#allocation3 + $0x98] sm:$0xff]
    %v1142 = vld [vmem:[#allocation3 + $0xa0] sm:$0xff]
    %v1143 = vld [vmem:[#allocation3 + $0xa8] sm:$0xff]
    %v1144 = vld [vmem:[#allocation3 + $0xb0] sm:$0xff]
    %v1145 = vld [vmem:[#allocation3 + $0xb8] sm:$0xff]
    %v1146 = vld [vmem:[#allocation3 + $0xc0] sm:$0xff]
    %v1147 = vld [vmem:[#allocation3 + $0xc8] sm:$0xff]
    %v1148 = vld [vmem:[#allocation3 + $0xd0] sm:$0xff]
    %v1149 = vld [vmem:[#allocation3 + $0xd8] sm:$0xff]
    %v1150 = vld [vmem:[#allocation3 + $0xe0] sm:$0xff]
    %v1151 = vld [vmem:[#allocation3 + $0xe8] sm:$0xff]
    %v1152 = vld [vmem:[#allocation3 + $0xf0] sm:$0xff]
    %v1153 = vld [vmem:[#allocation3 + $0xf8] sm:$0xff]
    %v1154 = vld [vmem:[#allocation3 + $0x100] sm:$0xff]
    %v1155 = vld [vmem:[#allocation3 + $0x108] sm:$0xff]
    %v1156 = vld [vmem:[#allocation3 + $0x110] sm:$0xff]
    %v1157 = vld [vmem:[#allocation3 + $0x118] sm:$0xff]
    %v1159 = vsel %vm469, %v1121, 0
    %1161 = vmatpush.msra.mxu0 0.0
    %1162 = vmatpush.msra.mxu0 0.0
    %1163 = vmatpush.msra.mxu0 0.0
    %1164 = vmatpush.msra.mxu0 0.0
    %1165 = vmatpush.msra.mxu0 0.0
    %1166 = vmatpush.msra.mxu0 0.0
    %1167 = vmatpush.msra.mxu0 0.0
    %1168 = vmatpush.msra.mxu0 %v1154
    %1169 = vmatpush.msra.mxu0 %v1150
    %1170 = vmatpush.msra.mxu0 %v1146
    %1171 = vmatpush.msra.mxu0 %v1142
    %1172 = vmatpush.msra.mxu0 %v1138
    %1173 = vmatpush.msra.mxu0 %v1134
    %1174 = vmatpush.msra.mxu0 %v1130
    %1175 = vmatpush.msra.mxu0 %v1126
    %1176 = vmatpush.msra.mxu0 %v1122
    %1177 = vmatmul.f32.gmra.mxu0 %v1159
    %v1178 = vpop.f32.mrf.mxu0
    %v1179 = vadd.f32 0.0, %v1178
    %1180 = vdwg.mxu0
    %1181 = vmatpush.msra.mxu0 0.0
    %1182 = vmatpush.msra.mxu0 0.0
    %1183 = vmatpush.msra.mxu0 0.0
    %1184 = vmatpush.msra.mxu0 0.0
    %1185 = vmatpush.msra.mxu0 0.0
    %1186 = vmatpush.msra.mxu0 0.0
    %1187 = vmatpush.msra.mxu0 0.0
    %1188 = vmatpush.msra.mxu0 %v1155
    %1189 = vmatpush.msra.mxu0 %v1151
    %1190 = vmatpush.msra.mxu0 %v1147
    %1191 = vmatpush.msra.mxu0 %v1143
    %1192 = vmatpush.msra.mxu0 %v1139
    %1193 = vmatpush.msra.mxu0 %v1135
    %1194 = vmatpush.msra.mxu0 %v1131
    %1195 = vmatpush.msra.mxu0 %v1127
    %1196 = vmatpush.msra.mxu0 %v1123
    %1197 = vmatmul.f32.gmra.mxu0 %v1159
    %v1198 = vpop.f32.mrf.mxu0
    %v1199 = vadd.f32 0.0, %v1198
    %1200 = vdwg.mxu0
    %1201 = vmatpush.msra.mxu0 0.0
    %1202 = vmatpush.msra.mxu0 0.0
    %1203 = vmatpush.msra.mxu0 0.0
    %1204 = vmatpush.msra.mxu0 0.0
    %1205 = vmatpush.msra.mxu0 0.0
    %1206 = vmatpush.msra.mxu0 0.0
    %1207 = vmatpush.msra.mxu0 0.0
    %1208 = vmatpush.msra.mxu0 %v1156
    %1209 = vmatpush.msra.mxu0 %v1152
    %1210 = vmatpush.msra.mxu0 %v1148
    %1211 = vmatpush.msra.mxu0 %v1144
    %1212 = vmatpush.msra.mxu0 %v1140
    %1213 = vmatpush.msra.mxu0 %v1136
    %1214 = vmatpush.msra.mxu0 %v1132
    %1215 = vmatpush.msra.mxu0 %v1128
    %1216 = vmatpush.msra.mxu0 %v1124
    %1217 = vmatmul.f32.gmra.mxu0 %v1159
    %v1218 = vpop.f32.mrf.mxu0
    %v1219 = vadd.f32 0.0, %v1218
    %1220 = vdwg.mxu0
    %1221 = vmatpush.msra.mxu0 0.0
    %1222 = vmatpush.msra.mxu0 0.0
    %1223 = vmatpush.msra.mxu0 0.0
    %1224 = vmatpush.msra.mxu0 0.0
    %1225 = vmatpush.msra.mxu0 0.0
    %1226 = vmatpush.msra.mxu0 0.0
    %1227 = vmatpush.msra.mxu0 0.0
    %1228 = vmatpush.msra.mxu0 %v1157
    %1229 = vmatpush.msra.mxu0 %v1153
    %1230 = vmatpush.msra.mxu0 %v1149
    %1231 = vmatpush.msra.mxu0 %v1145
    %1232 = vmatpush.msra.mxu0 %v1141
    %1233 = vmatpush.msra.mxu0 %v1137
    %1234 = vmatpush.msra.mxu0 %v1133
    %1235 = vmatpush.msra.mxu0 %v1129
    %1236 = vmatpush.msra.mxu0 %v1125
    %1237 = vmatmul.f32.gmra.mxu0 %v1159
    %v1238 = vpop.f32.mrf.mxu0
    %v1239 = vadd.f32 0.0, %v1238
    %1240 = vdwg.mxu0
    %v1241 = vadd.f32 %v1179, %v1199
    %v1242 = vadd.f32 %v1241, %v1219
    %v1243 = vadd.f32 %v1242, %v1239
    %1244 = vadd.xlane.f32.xlu0 %v1243
    %v1245 = vpop.xlane.xlu0 %1244
    %v1246 = vmul.f32 %v1245, 0.001953125
    %v1247 = vsub.f32 %v1179, %v1246
    %v1248 = vsub.f32 %v1199, %v1246
    %v1249 = vsub.f32 %v1219, %v1246
    %v1250 = vsub.f32 %v1239, %v1246
    %v1251 = vmul.f32 %v1247, %v1247
    %v1252 = vmul.f32 %v1248, %v1248
    %v1253 = vmul.f32 %v1249, %v1249
    %v1254 = vmul.f32 %v1250, %v1250
    %v1255 = vadd.f32 %v1251, %v1252
    %v1256 = vadd.f32 %v1255, %v1253
    %v1257 = vadd.f32 %v1256, %v1254
    %1258 = vadd.xlane.f32.xlu0 %v1257
    %v1259 = vpop.xlane.xlu0 %1258
    %v1260 = vmul.f32 %v1259, 0.001953125
    %v1261 = vadd.f32 %v1260, 0.0001
    %v1262 = vrsqrt.pop %v1261
    %v1263 = vmul.f32 %v1262, %v1261
    %v1264 = vmul.f32 %v1263, %v1262
    %v1265 = vmul.f32 0.5, %v1264
    %v1266 = vsub.f32 1.5, %v1265
    %v1267 = vmul.f32 %v1262, %v1266
    %vm1268 = vweird.f32 %v1261
    %vm1269 = vweird.f32 %v1262
    %vm1270 = vmor %vm1268, %vm1269
    %v1271 = vsel %vm1270, %v1262, %v1267
    %v1272 = vld [vmem:[%s11] sm:$0xff]
    %v1273 = vmul.f32 %v1271, %v1272
    %1275 = vset.pattern.permute.xlu0 0
    %1276 = vperm.xlu0 %1275, %v1273
    %v1277 = vpop.permute.xlu0 %1276
    %v1279 = vmul.f32 %v1247, %v1277
    %v1280 = vmul.f32 %v1248, %v1277
    %v1281 = vmul.f32 %v1249, %v1277
    %v1282 = vmul.f32 %v1250, %v1277
    %v1283 = vld [vmem:[%s12] sm:$0xff]
    %1285 = vset.pattern.permute.xlu0 0
    %1286 = vperm.xlu0 %1285, %v1283
    %v1287 = vpop.permute.xlu0 %1286
    %v1289 = vadd.f32 %v1279, %v1287
    %v1290 = vadd.f32 %v1280, %v1287
    %v1291 = vadd.f32 %v1281, %v1287
    %v1292 = vadd.f32 %v1282, %v1287
    %v1293 = vmax.f32 %v1289, 0.0
    %v1294 = vmax.f32 %v1290, 0.0
    %v1295 = vmax.f32 %v1291, 0.0
    %v1296 = vmax.f32 %v1292, 0.0
    %1297 = vst [vmem:[%s13] sm:$0xff] %v1293
    %1298 = vst [vmem:[%s13 + $0x8] sm:$0xff] %v1294
    %s1299 = scalar_lea.vmem %s13, 16
    %1300 = vst [vmem:[%s1299] sm:$0xff] %v1295
    %1301 = vst [vmem:[%s1299 + $0x8] sm:$0xff] %v1296
    // Predicated region
    $region58: #{stack_decoder_forward.1} parent=1 // pred_check
      _
    $region59: #{stack_decoder_forward.1} parent=1 // pred_check_branch
      %1303 = sbr.rel (0) target = $region61
    $region60: #{stack_decoder_forward.1} parent=1 // pred_region
      _
    $region61: #{stack_decoder_forward.1} parent=1 // pred_fallthru
      _
    // Predicated region
    $region62: #{stack_decoder_forward.1} parent=1 // pred_check
      _
    $region63: #{stack_decoder_forward.1} parent=1 // pred_check_branch
      %1305 = sbr.rel (0) target = $region65
    $region64: #{stack_decoder_forward.1} parent=1 // pred_region
      _
    $region65: #{stack_decoder_forward.1} parent=1 // pred_fallthru
      _
    %1306 = vsyncpa [#allocation5], 1

</llo_original>
